<compile_context>
chip_gen: v7x
topology: tpu7x:2x2x1
jax: 0.10.0
libtpu: 0.0.40
codegen_flags: <defaults>
</compile_context>

<pallas_src>
import numpy as np

import jax
import jax.numpy as jnp
from jax import lax
from jax.experimental import pallas as pl
from jax.experimental.pallas import tpu as pltpu


# ---------------------------------------------------------------------------
# Bilinear interpolation operator, matching PyTorch F.interpolate
# (mode='bilinear', align_corners=False, which is what F.upsample uses here).
# ---------------------------------------------------------------------------
def _bilinear_matrix(out_size, in_size, align_corners=False):
    if align_corners and out_size > 1:
        src = np.arange(out_size) * (in_size - 1) / max(out_size - 1, 1)
    else:
        scale = in_size / out_size
        src = (np.arange(out_size) + 0.5) * scale - 0.5
        src = np.maximum(src, 0.0)
    i0 = np.clip(np.floor(src).astype(np.int64), 0, in_size - 1)
    i1 = np.minimum(i0 + 1, in_size - 1)
    w_hi = (src - i0).astype(np.float32)
    w_lo = (1.0 - w_hi).astype(np.float32)
    mat = np.zeros((out_size, in_size), np.float32)
    mat[np.arange(out_size), i0] += w_lo
    mat[np.arange(out_size), i1] += w_hi
    return mat


def _flat_bilinear_operator(h, w, hk, wk):
    a_h = _bilinear_matrix(h, hk)            # (h, hk)
    a_w = _bilinear_matrix(w, wk)            # (w, wk)
    # B[(i*wk + j), (oi*w + oj)] = a_h[oi, i] * a_w[oj, j]
    return np.kron(a_h, a_w).T.copy()        # (hk*wk, h*w), float32


# ---------------------------------------------------------------------------
# Fused SPPblock kernel (one grid step == one image).
# ---------------------------------------------------------------------------
def _spp_kernel(p2_ref, p3_ref, p4_ref, x_ref, wc_ref,
                b2_ref, b3_ref, b4_ref, r2_ref, r3_ref, r4_ref,
                w1_ref, w2_ref, ws_ref, o_ref):
    f32, bf16 = jnp.float32, jnp.bfloat16
    cin = p2_ref.shape[1]
    cout = x_ref.shape[1]
    s = x_ref.shape[2]
    inv_s = 1.0 / float(s)

    wc = wc_ref[...]                                        # (cin, cin) f32
    p2 = p2_ref[0]                                          # (cin, s2) f32
    p3 = p3_ref[0]                                          # (cin, s3) f32
    p4 = p4_ref[0]                                          # (cin, s4) f32
    xv = x_ref[0]                                           # (cout, s) f32

    # --- SE global-average-pool inputs, fully f32 and without materializing
    #     any upsampled map:  mean_s(Wc @ p @ B) = Wc @ (p @ (B @ 1 / s)).
    def branch_mean(p, r_ref):
        pre = jnp.sum(p * r_ref[...], axis=1, keepdims=True)     # (cin, 1)
        return jnp.dot(wc, pre, preferred_element_type=f32)      # (cin, 1)

    m2 = branch_mean(p2, r2_ref)
    m3 = branch_mean(p3, r3_ref)
    m4 = branch_mean(p4, r4_ref)
    mx = jnp.sum(xv, axis=1, keepdims=True) * inv_s               # (cout, 1)

    # --- SELayer1 gate: Linear -> ReLU -> Linear -> sigmoid (all f32). The
    #     channel concat is never built: fc1 is sliced per concat part.
    w1 = w1_ref[...]                                        # (hidden, ccat)
    z = (jnp.dot(w1[:, 0:cin], m2, preferred_element_type=f32)
         + jnp.dot(w1[:, cin:2 * cin], m3, preferred_element_type=f32)
         + jnp.dot(w1[:, 2 * cin:3 * cin], m4, preferred_element_type=f32)
         + jnp.dot(w1[:, 3 * cin:], mx, preferred_element_type=f32))
    z = jnp.maximum(z, 0.0)                                 # (hidden, 1)
    gv = jnp.dot(w2_ref[...], z, preferred_element_type=f32)     # (ccat, 1)
    gv = 1.0 / (1.0 + jnp.exp(-gv))                         # sigmoid, f32

    ws = ws_ref[...]                                        # (cout, ccat) f32

    # --- Per-branch fold:  Ws_k @ diag(g_k) @ Wc  is a tiny (cout, cin) f32
    #     weight; the only large matmuls are (cout, sk) and (cout, s), bf16
    #     operands with f32 accumulation on the MXU.
    def branch_out(p, b_ref, lo):
        g = gv[lo:lo + cin]                                 # (cin, 1)
        w_eff = jnp.dot(ws[:, lo:lo + cin], wc * g,
                        preferred_element_type=f32)         # (cout, cin) f32
        t = jnp.dot(w_eff.astype(bf16), p.astype(bf16),
                    preferred_element_type=f32)             # (cout, sk) f32
        return jnp.dot(t.astype(bf16), b_ref[...],
                       preferred_element_type=f32)          # (cout, s) f32

    acc = branch_out(p2, b2_ref, 0)
    acc += branch_out(p3, b3_ref, cin)
    acc += branch_out(p4, b4_ref, 2 * cin)

    # --- x part of the concat: gate the activation rows, then 1x1 conv.
    gx = gv[3 * cin:]                                       # (cout, 1)
    acc += jnp.dot(ws[:, 3 * cin:].astype(bf16),
                   (xv * gx).astype(bf16),
                   preferred_element_type=f32)              # (cout, s) f32

    o_ref[0] = acc.astype(o_ref.dtype)


# ---------------------------------------------------------------------------
# Public wrapper: NCHW in / NCHW out, matching the PyTorch module.
# ---------------------------------------------------------------------------
@jax.jit
def sppblock_forward(x_up, x, conv_w, fc1_w, fc2_w, conv_smooth_w):
    """SPPblock forward (inference).

    x_up:          (N, Cin, H, W)    input of the pooling pyramid
    x:             (N, Cout, h, w)   tensor concatenated with the pyramid
    conv_w:        (Cin, Cin, 1, 1)  self.conv (1x1, bias=False)
    fc1_w:         (Ccat//16, Ccat)  SELayer1 fc[0] weight
    fc2_w:         (Ccat, Ccat//16)  SELayer1 fc[2] weight
    conv_smooth_w: (Cout, Ccat, 1, 1) self.conv_smoonth (1x1, bias=False)
    with Ccat = 3*Cin + Cout.
    """
    n, cin, _, _ = x_up.shape
    n2, cout, h, w = x.shape
    assert n == n2
    ccat = 3 * cin + cout
    hidden = fc1_w.shape[0]
    assert fc1_w.shape == (hidden, ccat)
    assert fc2_w.shape == (ccat, hidden)
    assert conv_w.shape == (cin, cin, 1, 1)
    assert conv_smooth_w.shape == (cout, ccat, 1, 1)

    f32, bf16 = jnp.float32, jnp.bfloat16
    s = h * w

    # Max-pool pyramid (kernel == stride, floor mode). Left to XLA: a trivially
    # memory-bound reduction; keeps the Pallas kernel free of window relayouts.
    def maxpool(t, k):
        return lax.reduce_window(t, -jnp.inf, lax.max,
                                 (1, 1, k, k), (1, 1, k, k), "VALID")

    pooled_flat, up_ops, mean_rows, sdims = [], [], [], []
    for k in (2, 3, 6):
        p = maxpool(x_up.astype(f32), k)
        hk, wk = p.shape[2], p.shape[3]
        b_np = _flat_bilinear_operator(h, w, hk, wk)            # (hk*wk, s) f32
        pooled_flat.append(p.reshape(n, cin, hk * wk))          # free reshape
        up_ops.append(jnp.asarray(b_np, bf16))                  # (sk, s) bf16
        # B @ 1 / s as a lane-row vector, kept in f32 for accurate SE means.
        mean_rows.append(jnp.asarray(b_np.sum(axis=1)[None, :] / s, f32))
        sdims.append(hk * wk)

    x_flat = x.astype(f32).reshape(n, cout, s)                  # free reshape
    wc = conv_w.reshape(cin, cin).astype(f32)
    ws = conv_smooth_w.reshape(cout, ccat).astype(f32)
    w1 = fc1_w.astype(f32)
    w2 = fc2_w.astype(f32)

    def per_img(shape):   # (1, C, S) block of a batched array
        return pl.BlockSpec((1,) + shape, lambda nn: (nn, 0, 0))

    def full(shape):      # whole (small) weight / operator array
        return pl.BlockSpec(shape, lambda nn: (0,) * len(shape))

    out_flat = pl.pallas_call(
        _spp_kernel,
        out_shape=jax.ShapeDtypeStruct((n, cout, s), f32),
        grid_spec=pltpu.PrefetchScalarGridSpec(
            num_scalar_prefetch=0,
            grid=(n,),
            in_specs=[
                per_img((cin, sdims[0])),     # pooled k=2 (flattened)
                per_img((cin, sdims[1])),     # pooled k=3
                per_img((cin, sdims[2])),     # pooled k=6
                per_img((cout, s)),           # x (flattened)
                full((cin, cin)),             # shared 1x1 conv weight (f32)
                full((sdims[0], s)),          # upsample operator k=2 (bf16)
                full((sdims[1], s)),          # upsample operator k=3
                full((sdims[2], s)),          # upsample operator k=6
                full((1, sdims[0])),          # B2 @ 1 / s (f32)
                full((1, sdims[1])),          # B3 @ 1 / s
                full((1, sdims[2])),          # B4 @ 1 / s
                full((hidden, ccat)),         # SE fc1
                full((ccat, hidden)),         # SE fc2
                full((cout, ccat)),           # conv_smoonth weight (f32)
            ],
            out_specs=per_img((cout, s)),
        ),
        compiler_params=pltpu.CompilerParams(
            dimension_semantics=("parallel",)),
    )(pooled_flat[0], pooled_flat[1], pooled_flat[2], x_flat,
      wc, up_ops[0], up_ops[1], up_ops[2],
      mean_rows[0], mean_rows[1], mean_rows[2], w1, w2, ws)

    return out_flat.reshape(n, cout, h, w)


# ---------------------------------------------------------------------------
# Pure-JAX float32 reference (mirrors the PyTorch forward).
# ---------------------------------------------------------------------------
def _reference(x_up, x, conv_w, fc1_w, fc2_w, conv_smooth_w):
    n, cin, _, _ = x_up.shape
    _, cout, h, w = x.shape
    ccat = 3 * cin + cout
    wc = conv_w.reshape(cin, cin)
    ws = conv_smooth_w.reshape(cout, ccat)

    def maxpool(t, k):
        return lax.reduce_window(t, -jnp.inf, lax.max,
                                 (1, 1, k, k), (1, 1, k, k), "VALID")

    def conv1x1(t, wgt):
        return jnp.einsum("oc,nchw->nohw", wgt, t)

    def upsample(t):
        a_h = jnp.asarray(_bilinear_matrix(h, t.shape[2]))
        a_w = jnp.asarray(_bilinear_matrix(w, t.shape[3]))
        return jnp.einsum("hH,ncHW,wW->nchw", a_h, t, a_w)

    l2 = upsample(conv1x1(maxpool(x_up, 2), wc))
    l3 = upsample(conv1x1(maxpool(x_up, 3), wc))
    l4 = upsample(conv1x1(maxpool(x_up, 6), wc))
    cat = jnp.concatenate([l2, l3, l4, x], axis=1)              # (n, ccat, h, w)

    m = jnp.mean(cat, axis=(2, 3))                              # (n, ccat)
    z = jnp.maximum(m @ fc1_w.T, 0.0)
    g = jax.nn.sigmoid(z @ fc2_w.T)                             # (n, ccat)
    se = cat * g[:, :, None, None]
    return jnp.einsum("oc,nchw->nohw", ws, se)


if __name__ == "__main__":
    # SPPblock(in_channels=4, out_channels=8); spatial 24 (divisible by 2,3,6).
    n, cin, cout = 2, 4, 8
    hu = wu = 24
    h = w = 24
    ccat = 3 * cin + cout
    hidden = ccat // 16
    assert hidden >= 1

    key = jax.random.PRNGKey(0)
    k1, k2, k3, k4, k5, k6 = jax.random.split(key, 6)
    x_up = jax.random.normal(k1, (n, cin, hu, wu), jnp.float32)
    x = jax.random.normal(k2, (n, cout, h, w), jnp.float32)
    conv_w = jax.random.normal(k3, (cin, cin, 1, 1), jnp.float32) * 0.3
    fc1_w = jax.random.normal(k4, (hidden, ccat), jnp.float32) * 0.3
    fc2_w = jax.random.normal(k5, (ccat, hidden), jnp.float32) * 0.3
    conv_smooth_w = jax.random.normal(k6, (cout, ccat, 1, 1), jnp.float32) * 0.2

    out = sppblock_forward(x_up, x, conv_w, fc1_w, fc2_w, conv_smooth_w)
    out = jax.block_until_ready(out)

    ref = _reference(x_up, x, conv_w, fc1_w, fc2_w, conv_smooth_w)
    assert out.shape == (n, cout, h, w)
    max_err = float(jnp.max(jnp.abs(out - ref)))
    assert jnp.allclose(out, ref, atol=2e-2, rtol=2e-2), \
        f"mismatch vs reference (max abs err {max_err})"

    print("KERNEL_OK")
</pallas_src>

<mosaic_0001>
module attributes {stable_mosaic.version = 11 : i64} {
  func.func @_spp_kernel(%arg0: i32, %arg1: memref<1x4x144xf32, #tpu.memory_space<vmem>>, %arg2: memref<1x4x64xf32, #tpu.memory_space<vmem>>, %arg3: memref<1x4x16xf32, #tpu.memory_space<vmem>>, %arg4: memref<1x8x576xf32, #tpu.memory_space<vmem>>, %arg5: memref<4x4xf32, #tpu.memory_space<vmem>>, %arg6: memref<144x576xbf16, #tpu.memory_space<vmem>>, %arg7: memref<64x576xbf16, #tpu.memory_space<vmem>>, %arg8: memref<16x576xbf16, #tpu.memory_space<vmem>>, %arg9: memref<1x144xf32, #tpu.memory_space<vmem>>, %arg10: memref<1x64xf32, #tpu.memory_space<vmem>>, %arg11: memref<1x16xf32, #tpu.memory_space<vmem>>, %arg12: memref<1x20xf32, #tpu.memory_space<vmem>>, %arg13: memref<20x1xf32, #tpu.memory_space<vmem>>, %arg14: memref<8x20xf32, #tpu.memory_space<vmem>>, %arg15: memref<1x8x576xf32, #tpu.memory_space<vmem>>) attributes {dimension_semantics = [#tpu.dimension_semantics<parallel>], iteration_bounds = array<i64: 2>, scalar_prefetch = 0 : i64, scratch_operands = 0 : i64, tpu.core_type = #tpu.core_type<tc>, window_params = [{transform_indices = @transform_0, window_bounds = array<i64: 1, 4, 144>}, {transform_indices = @transform_1, window_bounds = array<i64: 1, 4, 64>}, {transform_indices = @transform_2, window_bounds = array<i64: 1, 4, 16>}, {transform_indices = @transform_3, window_bounds = array<i64: 1, 8, 576>}, {pipeline_mode = #tpu.pipeline_mode<synchronous>, transform_indices = @transform_4, window_bounds = array<i64: 4, 4>}, {pipeline_mode = #tpu.pipeline_mode<synchronous>, transform_indices = @transform_5, window_bounds = array<i64: 144, 576>}, {pipeline_mode = #tpu.pipeline_mode<synchronous>, transform_indices = @transform_6, window_bounds = array<i64: 64, 576>}, {pipeline_mode = #tpu.pipeline_mode<synchronous>, transform_indices = @transform_7, window_bounds = array<i64: 16, 576>}, {pipeline_mode = #tpu.pipeline_mode<synchronous>, transform_indices = @transform_8, window_bounds = array<i64: 1, 144>}, {pipeline_mode = #tpu.pipeline_mode<synchronous>, transform_indices = @transform_9, window_bounds = array<i64: 1, 64>}, {pipeline_mode = #tpu.pipeline_mode<synchronous>, transform_indices = @transform_10, window_bounds = array<i64: 1, 16>}, {pipeline_mode = #tpu.pipeline_mode<synchronous>, transform_indices = @transform_11, window_bounds = array<i64: 1, 20>}, {pipeline_mode = #tpu.pipeline_mode<synchronous>, transform_indices = @transform_12, window_bounds = array<i64: 20, 1>}, {pipeline_mode = #tpu.pipeline_mode<synchronous>, transform_indices = @transform_13, window_bounds = array<i64: 8, 20>}, {transform_indices = @transform_14, window_bounds = array<i64: 1, 8, 576>}]} {
    %c0 = arith.constant 0 : index
    %c0_0 = arith.constant 0 : index
    %0 = vector.load %arg5[%c0, %c0_0] : memref<4x4xf32, #tpu.memory_space<vmem>>, vector<4x4xf32>
    %c0_1 = arith.constant 0 : index
    %c0_2 = arith.constant 0 : index
    %c0_3 = arith.constant 0 : index
    %1 = vector.load %arg1[%c0_1, %c0_2, %c0_3] : memref<1x4x144xf32, #tpu.memory_space<vmem>>, vector<1x4x144xf32>
    %2 = vector.shape_cast %1 : vector<1x4x144xf32> to vector<4x144xf32>
    %c0_4 = arith.constant 0 : index
    %c0_5 = arith.constant 0 : index
    %c0_6 = arith.constant 0 : index
    %3 = vector.load %arg2[%c0_4, %c0_5, %c0_6] : memref<1x4x64xf32, #tpu.memory_space<vmem>>, vector<1x4x64xf32>
    %4 = vector.shape_cast %3 : vector<1x4x64xf32> to vector<4x64xf32>
    %c0_7 = arith.constant 0 : index
    %c0_8 = arith.constant 0 : index
    %c0_9 = arith.constant 0 : index
    %5 = vector.load %arg3[%c0_7, %c0_8, %c0_9] : memref<1x4x16xf32, #tpu.memory_space<vmem>>, vector<1x4x16xf32>
    %6 = vector.shape_cast %5 : vector<1x4x16xf32> to vector<4x16xf32>
    %c0_10 = arith.constant 0 : index
    %c0_11 = arith.constant 0 : index
    %c0_12 = arith.constant 0 : index
    %7 = vector.load %arg4[%c0_10, %c0_11, %c0_12] : memref<1x8x576xf32, #tpu.memory_space<vmem>>, vector<1x8x576xf32>
    %8 = vector.shape_cast %7 : vector<1x8x576xf32> to vector<8x576xf32>
    %c0_13 = arith.constant 0 : index
    %c0_14 = arith.constant 0 : index
    %9 = vector.load %arg9[%c0_13, %c0_14] : memref<1x144xf32, #tpu.memory_space<vmem>>, vector<1x144xf32>
    %10 = vector.broadcast %9 : vector<1x144xf32> to vector<4x144xf32>
    %11 = arith.mulf %2, %10 : vector<4x144xf32>
    %cst = arith.constant dense<0.000000e+00> : vector<4xf32>
    %12 = vector.multi_reduction <add>, %11, %cst [1] : vector<4x144xf32> to vector<4xf32>
    %13 = vector.shape_cast %12 : vector<4xf32> to vector<4x1xf32>
    %cst_15 = arith.constant dense<0.000000e+00> : vector<4x1xf32>
    %14 = tpu.matmul %0, %13, %cst_15 {dimension_numbers = #tpu.dot_dimension_numbers<[1], [0], [0], [1], [0, 0, 1, 1], [], []>} : vector<4x4xf32>, vector<4x1xf32>, vector<4x1xf32> -> vector<4x1xf32>
    %c0_16 = arith.constant 0 : index
    %c0_17 = arith.constant 0 : index
    %15 = vector.load %arg10[%c0_16, %c0_17] : memref<1x64xf32, #tpu.memory_space<vmem>>, vector<1x64xf32>
    %16 = vector.broadcast %15 : vector<1x64xf32> to vector<4x64xf32>
    %17 = arith.mulf %4, %16 : vector<4x64xf32>
    %cst_18 = arith.constant dense<0.000000e+00> : vector<4xf32>
    %18 = vector.multi_reduction <add>, %17, %cst_18 [1] : vector<4x64xf32> to vector<4xf32>
    %19 = vector.shape_cast %18 : vector<4xf32> to vector<4x1xf32>
    %cst_19 = arith.constant dense<0.000000e+00> : vector<4x1xf32>
    %20 = tpu.matmul %0, %19, %cst_19 {dimension_numbers = #tpu.dot_dimension_numbers<[1], [0], [0], [1], [0, 0, 1, 1], [], []>} : vector<4x4xf32>, vector<4x1xf32>, vector<4x1xf32> -> vector<4x1xf32>
    %c0_20 = arith.constant 0 : index
    %c0_21 = arith.constant 0 : index
    %21 = vector.load %arg11[%c0_20, %c0_21] : memref<1x16xf32, #tpu.memory_space<vmem>>, vector<1x16xf32>
    %22 = vector.broadcast %21 : vector<1x16xf32> to vector<4x16xf32>
    %23 = arith.mulf %6, %22 : vector<4x16xf32>
    %cst_22 = arith.constant dense<0.000000e+00> : vector<4xf32>
    %24 = vector.multi_reduction <add>, %23, %cst_22 [1] : vector<4x16xf32> to vector<4xf32>
    %25 = vector.shape_cast %24 : vector<4xf32> to vector<4x1xf32>
    %cst_23 = arith.constant dense<0.000000e+00> : vector<4x1xf32>
    %26 = tpu.matmul %0, %25, %cst_23 {dimension_numbers = #tpu.dot_dimension_numbers<[1], [0], [0], [1], [0, 0, 1, 1], [], []>} : vector<4x4xf32>, vector<4x1xf32>, vector<4x1xf32> -> vector<4x1xf32>
    %cst_24 = arith.constant dense<0.000000e+00> : vector<8xf32>
    %27 = vector.multi_reduction <add>, %8, %cst_24 [1] : vector<8x576xf32> to vector<8xf32>
    %28 = vector.shape_cast %27 : vector<8xf32> to vector<8x1xf32>
    %cst_25 = arith.constant 0.00173611112 : f32
    %29 = vector.broadcast %cst_25 : f32 to vector<8x1xf32>
    %30 = arith.mulf %28, %29 : vector<8x1xf32>
    %c0_26 = arith.constant 0 : index
    %c0_27 = arith.constant 0 : index
    %31 = vector.load %arg12[%c0_26, %c0_27] : memref<1x20xf32, #tpu.memory_space<vmem>>, vector<1x20xf32>
    %32 = vector.extract_strided_slice %31 {offsets = [0, 0], sizes = [1, 4], strides = [1, 1]} : vector<1x20xf32> to vector<1x4xf32>
    %cst_28 = arith.constant dense<0.000000e+00> : vector<1x1xf32>
    %33 = tpu.matmul %32, %14, %cst_28 {dimension_numbers = #tpu.dot_dimension_numbers<[1], [0], [0], [1], [0, 0, 1, 1], [], []>} : vector<1x4xf32>, vector<4x1xf32>, vector<1x1xf32> -> vector<1x1xf32>
    %34 = vector.extract_strided_slice %31 {offsets = [0, 4], sizes = [1, 4], strides = [1, 1]} : vector<1x20xf32> to vector<1x4xf32>
    %cst_29 = arith.constant dense<0.000000e+00> : vector<1x1xf32>
    %35 = tpu.matmul %34, %20, %cst_29 {dimension_numbers = #tpu.dot_dimension_numbers<[1], [0], [0], [1], [0, 0, 1, 1], [], []>} : vector<1x4xf32>, vector<4x1xf32>, vector<1x1xf32> -> vector<1x1xf32>
    %36 = arith.addf %33, %35 : vector<1x1xf32>
    %37 = vector.extract_strided_slice %31 {offsets = [0, 8], sizes = [1, 4], strides = [1, 1]} : vector<1x20xf32> to vector<1x4xf32>
    %cst_30 = arith.constant dense<0.000000e+00> : vector<1x1xf32>
    %38 = tpu.matmul %37, %26, %cst_30 {dimension_numbers = #tpu.dot_dimension_numbers<[1], [0], [0], [1], [0, 0, 1, 1], [], []>} : vector<1x4xf32>, vector<4x1xf32>, vector<1x1xf32> -> vector<1x1xf32>
    %39 = arith.addf %36, %38 : vector<1x1xf32>
    %40 = vector.extract_strided_slice %31 {offsets = [0, 12], sizes = [1, 8], strides = [1, 1]} : vector<1x20xf32> to vector<1x8xf32>
    %cst_31 = arith.constant dense<0.000000e+00> : vector<1x1xf32>
    %41 = tpu.matmul %40, %30, %cst_31 {dimension_numbers = #tpu.dot_dimension_numbers<[1], [0], [0], [1], [0, 0, 1, 1], [], []>} : vector<1x8xf32>, vector<8x1xf32>, vector<1x1xf32> -> vector<1x1xf32>
    %42 = arith.addf %39, %41 : vector<1x1xf32>
    %cst_32 = arith.constant 0.000000e+00 : f32
    %43 = vector.broadcast %cst_32 : f32 to vector<1x1xf32>
    %44 = arith.maximumf %42, %43 : vector<1x1xf32>
    %c0_33 = arith.constant 0 : index
    %c0_34 = arith.constant 0 : index
    %45 = vector.load %arg13[%c0_33, %c0_34] : memref<20x1xf32, #tpu.memory_space<vmem>>, vector<20x1xf32>
    %cst_35 = arith.constant dense<0.000000e+00> : vector<20x1xf32>
    %46 = tpu.matmul %45, %44, %cst_35 {dimension_numbers = #tpu.dot_dimension_numbers<[1], [0], [0], [1], [0, 0, 1, 1], [], []>} : vector<20x1xf32>, vector<1x1xf32>, vector<20x1xf32> -> vector<20x1xf32>
    %cst_36 = arith.constant 0.000000e+00 : f32
    %47 = vector.broadcast %cst_36 : f32 to vector<20x1xf32>
    %48 = arith.subf %47, %46 : vector<20x1xf32>
    %49 = math.exp %48 : vector<20x1xf32>
    %cst_37 = arith.constant 1.000000e+00 : f32
    %50 = vector.broadcast %cst_37 : f32 to vector<20x1xf32>
    %51 = arith.addf %50, %49 : vector<20x1xf32>
    %cst_38 = arith.constant 1.000000e+00 : f32
    %52 = vector.broadcast %cst_38 : f32 to vector<20x1xf32>
    %53 = arith.divf %52, %51 : vector<20x1xf32>
    %c0_39 = arith.constant 0 : index
    %c0_40 = arith.constant 0 : index
    %54 = vector.load %arg14[%c0_39, %c0_40] : memref<8x20xf32, #tpu.memory_space<vmem>>, vector<8x20xf32>
    %55 = vector.extract_strided_slice %53 {offsets = [0, 0], sizes = [4, 1], strides = [1, 1]} : vector<20x1xf32> to vector<4x1xf32>
    %56 = vector.extract_strided_slice %54 {offsets = [0, 0], sizes = [8, 4], strides = [1, 1]} : vector<8x20xf32> to vector<8x4xf32>
    %57 = vector.broadcast %55 : vector<4x1xf32> to vector<4x4xf32>
    %58 = arith.mulf %0, %57 : vector<4x4xf32>
    %cst_41 = arith.constant dense<0.000000e+00> : vector<8x4xf32>
    %59 = tpu.matmul %56, %58, %cst_41 {dimension_numbers = #tpu.dot_dimension_numbers<[1], [0], [0], [1], [0, 0, 1, 1], [], []>} : vector<8x4xf32>, vector<4x4xf32>, vector<8x4xf32> -> vector<8x4xf32>
    %60 = arith.truncf %59 : vector<8x4xf32> to vector<8x4xbf16>
    %61 = arith.truncf %2 : vector<4x144xf32> to vector<4x144xbf16>
    %cst_42 = arith.constant dense<0.000000e+00> : vector<8x144xf32>
    %62 = tpu.matmul %60, %61, %cst_42 {dimension_numbers = #tpu.dot_dimension_numbers<[1], [0], [0], [1], [0, 0, 1, 1], [], []>} : vector<8x4xbf16>, vector<4x144xbf16>, vector<8x144xf32> -> vector<8x144xf32>
    %63 = arith.truncf %62 : vector<8x144xf32> to vector<8x144xbf16>
    %c0_43 = arith.constant 0 : index
    %c0_44 = arith.constant 0 : index
    %64 = vector.load %arg6[%c0_43, %c0_44] : memref<144x576xbf16, #tpu.memory_space<vmem>>, vector<144x576xbf16>
    %cst_45 = arith.constant dense<0.000000e+00> : vector<8x576xf32>
    %65 = tpu.matmul %63, %64, %cst_45 {dimension_numbers = #tpu.dot_dimension_numbers<[1], [0], [0], [1], [0, 0, 1, 1], [], []>} : vector<8x144xbf16>, vector<144x576xbf16>, vector<8x576xf32> -> vector<8x576xf32>
    %66 = vector.extract_strided_slice %53 {offsets = [4, 0], sizes = [4, 1], strides = [1, 1]} : vector<20x1xf32> to vector<4x1xf32>
    %67 = vector.extract_strided_slice %54 {offsets = [0, 4], sizes = [8, 4], strides = [1, 1]} : vector<8x20xf32> to vector<8x4xf32>
    %68 = vector.broadcast %66 : vector<4x1xf32> to vector<4x4xf32>
    %69 = arith.mulf %0, %68 : vector<4x4xf32>
    %cst_46 = arith.constant dense<0.000000e+00> : vector<8x4xf32>
    %70 = tpu.matmul %67, %69, %cst_46 {dimension_numbers = #tpu.dot_dimension_numbers<[1], [0], [0], [1], [0, 0, 1, 1], [], []>} : vector<8x4xf32>, vector<4x4xf32>, vector<8x4xf32> -> vector<8x4xf32>
    %71 = arith.truncf %70 : vector<8x4xf32> to vector<8x4xbf16>
    %72 = arith.truncf %4 : vector<4x64xf32> to vector<4x64xbf16>
    %cst_47 = arith.constant dense<0.000000e+00> : vector<8x64xf32>
    %73 = tpu.matmul %71, %72, %cst_47 {dimension_numbers = #tpu.dot_dimension_numbers<[1], [0], [0], [1], [0, 0, 1, 1], [], []>} : vector<8x4xbf16>, vector<4x64xbf16>, vector<8x64xf32> -> vector<8x64xf32>
    %74 = arith.truncf %73 : vector<8x64xf32> to vector<8x64xbf16>
    %c0_48 = arith.constant 0 : index
    %c0_49 = arith.constant 0 : index
    %75 = vector.load %arg7[%c0_48, %c0_49] : memref<64x576xbf16, #tpu.memory_space<vmem>>, vector<64x576xbf16>
    %cst_50 = arith.constant dense<0.000000e+00> : vector<8x576xf32>
    %76 = tpu.matmul %74, %75, %cst_50 {dimension_numbers = #tpu.dot_dimension_numbers<[1], [0], [0], [1], [0, 0, 1, 1], [], []>} : vector<8x64xbf16>, vector<64x576xbf16>, vector<8x576xf32> -> vector<8x576xf32>
    %77 = arith.addf %65, %76 : vector<8x576xf32>
    %78 = vector.extract_strided_slice %53 {offsets = [8, 0], sizes = [4, 1], strides = [1, 1]} : vector<20x1xf32> to vector<4x1xf32>
    %79 = vector.extract_strided_slice %54 {offsets = [0, 8], sizes = [8, 4], strides = [1, 1]} : vector<8x20xf32> to vector<8x4xf32>
    %80 = vector.broadcast %78 : vector<4x1xf32> to vector<4x4xf32>
    %81 = arith.mulf %0, %80 : vector<4x4xf32>
    %cst_51 = arith.constant dense<0.000000e+00> : vector<8x4xf32>
    %82 = tpu.matmul %79, %81, %cst_51 {dimension_numbers = #tpu.dot_dimension_numbers<[1], [0], [0], [1], [0, 0, 1, 1], [], []>} : vector<8x4xf32>, vector<4x4xf32>, vector<8x4xf32> -> vector<8x4xf32>
    %83 = arith.truncf %82 : vector<8x4xf32> to vector<8x4xbf16>
    %84 = arith.truncf %6 : vector<4x16xf32> to vector<4x16xbf16>
    %cst_52 = arith.constant dense<0.000000e+00> : vector<8x16xf32>
    %85 = tpu.matmul %83, %84, %cst_52 {dimension_numbers = #tpu.dot_dimension_numbers<[1], [0], [0], [1], [0, 0, 1, 1], [], []>} : vector<8x4xbf16>, vector<4x16xbf16>, vector<8x16xf32> -> vector<8x16xf32>
    %86 = arith.truncf %85 : vector<8x16xf32> to vector<8x16xbf16>
    %c0_53 = arith.constant 0 : index
    %c0_54 = arith.constant 0 : index
    %87 = vector.load %arg8[%c0_53, %c0_54] : memref<16x576xbf16, #tpu.memory_space<vmem>>, vector<16x576xbf16>
    %cst_55 = arith.constant dense<0.000000e+00> : vector<8x576xf32>
    %88 = tpu.matmul %86, %87, %cst_55 {dimension_numbers = #tpu.dot_dimension_numbers<[1], [0], [0], [1], [0, 0, 1, 1], [], []>} : vector<8x16xbf16>, vector<16x576xbf16>, vector<8x576xf32> -> vector<8x576xf32>
    %89 = arith.addf %77, %88 : vector<8x576xf32>
    %90 = vector.extract_strided_slice %53 {offsets = [12, 0], sizes = [8, 1], strides = [1, 1]} : vector<20x1xf32> to vector<8x1xf32>
    %91 = vector.extract_strided_slice %54 {offsets = [0, 12], sizes = [8, 8], strides = [1, 1]} : vector<8x20xf32> to vector<8x8xf32>
    %92 = arith.truncf %91 : vector<8x8xf32> to vector<8x8xbf16>
    %93 = vector.broadcast %90 : vector<8x1xf32> to vector<8x576xf32>
    %94 = arith.mulf %8, %93 : vector<8x576xf32>
    %95 = arith.truncf %94 : vector<8x576xf32> to vector<8x576xbf16>
    %cst_56 = arith.constant dense<0.000000e+00> : vector<8x576xf32>
    %96 = tpu.matmul %92, %95, %cst_56 {dimension_numbers = #tpu.dot_dimension_numbers<[1], [0], [0], [1], [0, 0, 1, 1], [], []>} : vector<8x8xbf16>, vector<8x576xbf16>, vector<8x576xf32> -> vector<8x576xf32>
    %97 = arith.addf %89, %96 : vector<8x576xf32>
    %c0_57 = arith.constant 0 : index
    %c0_58 = arith.constant 0 : index
    %c0_59 = arith.constant 0 : index
    %98 = vector.load %arg15[%c0_57, %c0_58, %c0_59] : memref<1x8x576xf32, #tpu.memory_space<vmem>>, vector<1x8x576xf32>
    %99 = vector.shape_cast %98 : vector<1x8x576xf32> to vector<8x576xf32>
    %100 = vector.shape_cast %97 : vector<8x576xf32> to vector<1x8x576xf32>
    tpu.vector_store %arg15[%c0_57, %c0_58, %c0_59], %100 {strides = array<i32>} : memref<1x8x576xf32, #tpu.memory_space<vmem>>, vector<1x8x576xf32>,
    return
  }
  func.func @transform_0(%arg0: i32) -> (i32, i32, i32) {
    %c0_i32 = arith.constant 0 : i32
    %c0_i32_0 = arith.constant 0 : i32
    %c0_i32_1 = arith.constant 0 : i32
    return %arg0, %c0_i32, %c0_i32_0 : i32, i32, i32
  }
  func.func @transform_1(%arg0: i32) -> (i32, i32, i32) {
    %c0_i32 = arith.constant 0 : i32
    %c0_i32_0 = arith.constant 0 : i32
    %c0_i32_1 = arith.constant 0 : i32
    return %arg0, %c0_i32, %c0_i32_0 : i32, i32, i32
  }
  func.func @transform_2(%arg0: i32) -> (i32, i32, i32) {
    %c0_i32 = arith.constant 0 : i32
    %c0_i32_0 = arith.constant 0 : i32
    %c0_i32_1 = arith.constant 0 : i32
    return %arg0, %c0_i32, %c0_i32_0 : i32, i32, i32
  }
  func.func @transform_3(%arg0: i32) -> (i32, i32, i32) {
    %c0_i32 = arith.constant 0 : i32
    %c0_i32_0 = arith.constant 0 : i32
    %c0_i32_1 = arith.constant 0 : i32
    return %arg0, %c0_i32, %c0_i32_0 : i32, i32, i32
  }
  func.func @transform_4(%arg0: i32) -> (i32, i32) {
    %c0_i32 = arith.constant 0 : i32
    %c0_i32_0 = arith.constant 0 : i32
    %c0_i32_1 = arith.constant 0 : i32
    return %c0_i32, %c0_i32_0 : i32, i32
  }
  func.func @transform_5(%arg0: i32) -> (i32, i32) {
    %c0_i32 = arith.constant 0 : i32
    %c0_i32_0 = arith.constant 0 : i32
    %c0_i32_1 = arith.constant 0 : i32
    return %c0_i32, %c0_i32_0 : i32, i32
  }
  func.func @transform_6(%arg0: i32) -> (i32, i32) {
    %c0_i32 = arith.constant 0 : i32
    %c0_i32_0 = arith.constant 0 : i32
    %c0_i32_1 = arith.constant 0 : i32
    return %c0_i32, %c0_i32_0 : i32, i32
  }
  func.func @transform_7(%arg0: i32) -> (i32, i32) {
    %c0_i32 = arith.constant 0 : i32
    %c0_i32_0 = arith.constant 0 : i32
    %c0_i32_1 = arith.constant 0 : i32
    return %c0_i32, %c0_i32_0 : i32, i32
  }
  func.func @transform_8(%arg0: i32) -> (i32, i32) {
    %c0_i32 = arith.constant 0 : i32
    %c0_i32_0 = arith.constant 0 : i32
    %c0_i32_1 = arith.constant 0 : i32
    return %c0_i32, %c0_i32_0 : i32, i32
  }
  func.func @transform_9(%arg0: i32) -> (i32, i32) {
    %c0_i32 = arith.constant 0 : i32
    %c0_i32_0 = arith.constant 0 : i32
    %c0_i32_1 = arith.constant 0 : i32
    return %c0_i32, %c0_i32_0 : i32, i32
  }
  func.func @transform_10(%arg0: i32) -> (i32, i32) {
    %c0_i32 = arith.constant 0 : i32
    %c0_i32_0 = arith.constant 0 : i32
    %c0_i32_1 = arith.constant 0 : i32
    return %c0_i32, %c0_i32_0 : i32, i32
  }
  func.func @transform_11(%arg0: i32) -> (i32, i32) {
    %c0_i32 = arith.constant 0 : i32
    %c0_i32_0 = arith.constant 0 : i32
    %c0_i32_1 = arith.constant 0 : i32
    return %c0_i32, %c0_i32_0 : i32, i32
  }
  func.func @transform_12(%arg0: i32) -> (i32, i32) {
    %c0_i32 = arith.constant 0 : i32
    %c0_i32_0 = arith.constant 0 : i32
    %c0_i32_1 = arith.constant 0 : i32
    return %c0_i32, %c0_i32_0 : i32, i32
  }
  func.func @transform_13(%arg0: i32) -> (i32, i32) {
    %c0_i32 = arith.constant 0 : i32
    %c0_i32_0 = arith.constant 0 : i32
    %c0_i32_1 = arith.constant 0 : i32
    return %c0_i32, %c0_i32_0 : i32, i32
  }
  func.func @transform_14(%arg0: i32) -> (i32, i32, i32) {
    %c0_i32 = arith.constant 0 : i32
    %c0_i32_0 = arith.constant 0 : i32
    %c0_i32_1 = arith.constant 0 : i32
    return %arg0, %c0_i32, %c0_i32_0 : i32, i32, i32
  }
}

</mosaic_0001>

<llo_original>
// kernel: sppblock_forward.1
$region0: #{sppblock_forward.1}
  #allocation0 [shape = 'u32[]', space=smem, size = 0x4, offset = 0x4, fixed_abs, tag = 'smem constant byte address 0x4 - core index']
  #allocation1 [shape = 'u32[144,128]{1,0:T(1,128)}', space=vmem, size = 0x12000, scoped, tag = 'internal scratch']
  %s0 = inlined_call_operand.vmem [shape: f32[2,4,144], index: 0, kind: input, shape index: {}]
  %s1 = inlined_call_operand.vmem [shape: f32[2,4,64], index: 1, kind: input, shape index: {}]
  %s2 = inlined_call_operand.vmem [shape: f32[2,4,16], index: 2, kind: input, shape index: {}]
  %s3 = inlined_call_operand.vmem [shape: f32[2,8,576], index: 3, kind: input, shape index: {}]
  %s4 = inlined_call_operand.vmem [shape: f32[4,4], index: 4, kind: input, shape index: {}]
  %s5 = inlined_call_operand.vmem [shape: bf16[144,576], index: 5, kind: input, shape index: {}]
  %s6 = inlined_call_operand.vmem [shape: bf16[64,576], index: 6, kind: input, shape index: {}]
  %s7 = inlined_call_operand.vmem [shape: bf16[16,576], index: 7, kind: input, shape index: {}]
  %s8 = inlined_call_operand.vmem [shape: f32[1,144], index: 8, kind: input, shape index: {}]
  %s9 = inlined_call_operand.vmem [shape: f32[1,64], index: 9, kind: input, shape index: {}]
  %s10 = inlined_call_operand.vmem [shape: f32[1,16], index: 10, kind: input, shape index: {}]
  %s11 = inlined_call_operand.vmem [shape: f32[1,20], index: 11, kind: input, shape index: {}]
  %s12 = inlined_call_operand.vmem [shape: f32[20,1], index: 12, kind: input, shape index: {}]
  %s13 = inlined_call_operand.vmem [shape: f32[8,20], index: 13, kind: input, shape index: {}]
  %s14 = inlined_call_operand.vmem [shape: f32[2,8,576], index: 14, kind: output, shape index: {}]
  %s15 = sld [smem:[#allocation0]]
  $region89: #{sppblock_forward.1} parent=0
    _
  %s17 = ssub.s32 1, %s15
  %s18 = scalar_select 0, %s17, %s15
  loop: start=0, step=1, limit=4
  $region2: #{sppblock_forward.1} parent=0 // loop_pre_header
    _
  $region3: #{sppblock_forward.1} parent=0 // loop_header
    %s20 = sphi 0, %s24
    %p21 = scmp.ge.s32.totalorder %s20, 4
    %s30 = sphi 0, %s32
    %s33 = sphi 0, %s30
    %s34 = sphi 0, %s33
    %s50 = sphi 0, %s34
    %s56 = sphi 0, %s58
    %s59 = sphi 0, %s56
    %s60 = sphi 0, %s59
    %s76 = sphi 0, %s60
    %s82 = sphi 0, %s84
    %s85 = sphi 0, %s82
    %s86 = sphi 0, %s85
    %s102 = sphi 0, %s86
    %s108 = sphi 0, %s110
    %s111 = sphi 0, %s108
    %s112 = sphi 0, %s111
    %s128 = sphi 0, %s112
    %s132 = sphi 0, %s132
    %s134 = sphi 0, %s132
    %s135 = sphi 0, %s134
    %s149 = sphi 0, %s135
    %s153 = sphi 0, %s153
    %s155 = sphi 0, %s153
    %s156 = sphi 0, %s155
    %s170 = sphi 0, %s156
    %s174 = sphi 0, %s174
    %s176 = sphi 0, %s174
    %s177 = sphi 0, %s176
    %s191 = sphi 0, %s177
    %s195 = sphi 0, %s195
    %s197 = sphi 0, %s195
    %s198 = sphi 0, %s197
    %s212 = sphi 0, %s198
    %s216 = sphi 0, %s216
    %s218 = sphi 0, %s216
    %s219 = sphi 0, %s218
    %s233 = sphi 0, %s219
    %s237 = sphi 0, %s237
    %s239 = sphi 0, %s237
    %s240 = sphi 0, %s239
    %s254 = sphi 0, %s240
    %s258 = sphi 0, %s258
    %s260 = sphi 0, %s258
    %s261 = sphi 0, %s260
    %s275 = sphi 0, %s261
    %s279 = sphi 0, %s279
    %s281 = sphi 0, %s279
    %s282 = sphi 0, %s281
    %s296 = sphi 0, %s282
    %s300 = sphi 0, %s300
    %s302 = sphi 0, %s300
    %s303 = sphi 0, %s302
    %s317 = sphi 0, %s303
    %s321 = sphi 0, %s321
    %s323 = sphi 0, %s321
    %s324 = sphi 0, %s323
    %s338 = sphi 0, %s324
    %s344 = sphi 0, %s346
    %s347 = sphi 0, %s344
    %s348 = sphi 0, %s347
    %s364 = sphi 0, %s348
  $region4: #{sppblock_forward.1} parent=0 // loop_header_branch
    %23 = sbr.rel (%p21) target = $region8
  $region5: #{sppblock_forward.1} parent=0 // loop_body
    %s25 = ssub.s32 %s20, 1
    %s26 = ssub.s32 %s20, 2
    %s27 = sadd.s32 %s20, 1
    %s28 = ssub.s32 %s20, %s27
    %p29 = scmp.eq.s32.totalorder %s28, 0
    %s31 = sadd.s32 %s30, 1
    %s32 = scalar_select %p29, %s30, %s31
    %p35 = pneg %p29
    %p36 = scmp.eq.s32.totalorder %s20, 1
    %p37 = por %p35, %p36
    %p38 = scmp.ne.s32.totalorder %s30, %s33
    %p39 = scmp.eq.s32.totalorder %s20, 0
    %p40 = por %p38, %p39
    %p41 = scmp.ne.s32.totalorder %s30, %s33
    %p42 = scmp.eq.s32.totalorder %s25, 1
    %p43 = por %p41, %p42
    %p44 = scmp.ne.s32.totalorder %s33, %s34
    %p45 = scmp.eq.s32.totalorder %s25, 0
    %p46 = por %p44, %p45
    %p47 = scmp.ne.s32.totalorder %s33, %s34
    %p48 = scmp.eq.s32.totalorder %s26, 1
    %p49 = por %p47, %p48
    %p51 = scmp.ne.s32.totalorder %s34, %s50
    %p52 = scmp.eq.s32.totalorder %s26, 0
    %p53 = por %p51, %p52
    %s54 = ssub.s32 %s20, %s27
    %p55 = scmp.eq.s32.totalorder %s54, 0
    %s57 = sadd.s32 %s56, 1
    %s58 = scalar_select %p55, %s56, %s57
    %p61 = pneg %p55
    %p62 = scmp.eq.s32.totalorder %s20, 1
    %p63 = por %p61, %p62
    %p64 = scmp.ne.s32.totalorder %s56, %s59
    %p65 = scmp.eq.s32.totalorder %s20, 0
    %p66 = por %p64, %p65
    %p67 = scmp.ne.s32.totalorder %s56, %s59
    %p68 = scmp.eq.s32.totalorder %s25, 1
    %p69 = por %p67, %p68
    %p70 = scmp.ne.s32.totalorder %s59, %s60
    %p71 = scmp.eq.s32.totalorder %s25, 0
    %p72 = por %p70, %p71
    %p73 = scmp.ne.s32.totalorder %s59, %s60
    %p74 = scmp.eq.s32.totalorder %s26, 1
    %p75 = por %p73, %p74
    %p77 = scmp.ne.s32.totalorder %s60, %s76
    %p78 = scmp.eq.s32.totalorder %s26, 0
    %p79 = por %p77, %p78
    %s80 = ssub.s32 %s20, %s27
    %p81 = scmp.eq.s32.totalorder %s80, 0
    %s83 = sadd.s32 %s82, 1
    %s84 = scalar_select %p81, %s82, %s83
    %p87 = pneg %p81
    %p88 = scmp.eq.s32.totalorder %s20, 1
    %p89 = por %p87, %p88
    %p90 = scmp.ne.s32.totalorder %s82, %s85
    %p91 = scmp.eq.s32.totalorder %s20, 0
    %p92 = por %p90, %p91
    %p93 = scmp.ne.s32.totalorder %s82, %s85
    %p94 = scmp.eq.s32.totalorder %s25, 1
    %p95 = por %p93, %p94
    %p96 = scmp.ne.s32.totalorder %s85, %s86
    %p97 = scmp.eq.s32.totalorder %s25, 0
    %p98 = por %p96, %p97
    %p99 = scmp.ne.s32.totalorder %s85, %s86
    %p100 = scmp.eq.s32.totalorder %s26, 1
    %p101 = por %p99, %p100
    %p103 = scmp.ne.s32.totalorder %s86, %s102
    %p104 = scmp.eq.s32.totalorder %s26, 0
    %p105 = por %p103, %p104
    %s106 = ssub.s32 %s20, %s27
    %p107 = scmp.eq.s32.totalorder %s106, 0
    %s109 = sadd.s32 %s108, 1
    %s110 = scalar_select %p107, %s108, %s109
    %p113 = pneg %p107
    %p114 = scmp.eq.s32.totalorder %s20, 1
    %p115 = por %p113, %p114
    %p116 = scmp.ne.s32.totalorder %s108, %s111
    %p117 = scmp.eq.s32.totalorder %s20, 0
    %p118 = por %p116, %p117
    %p119 = scmp.ne.s32.totalorder %s108, %s111
    %p120 = scmp.eq.s32.totalorder %s25, 1
    %p121 = por %p119, %p120
    %p122 = scmp.ne.s32.totalorder %s111, %s112
    %p123 = scmp.eq.s32.totalorder %s25, 0
    %p124 = por %p122, %p123
    %p125 = scmp.ne.s32.totalorder %s111, %s112
    %p126 = scmp.eq.s32.totalorder %s26, 1
    %p127 = por %p125, %p126
    %p129 = scmp.ne.s32.totalorder %s112, %s128
    %p130 = scmp.eq.s32.totalorder %s26, 0
    %p131 = por %p129, %p130
    %s133 = sadd.s32 %s132, 1
    %p136 = scmp.eq.s32.totalorder %s20, 1
    %p137 = scmp.ne.s32.totalorder %s132, %s134
    %p138 = scmp.eq.s32.totalorder %s20, 0
    %p139 = por %p137, %p138
    %p140 = scmp.ne.s32.totalorder %s132, %s134
    %p141 = scmp.eq.s32.totalorder %s25, 1
    %p142 = por %p140, %p141
    %p143 = scmp.ne.s32.totalorder %s134, %s135
    %p144 = scmp.eq.s32.totalorder %s25, 0
    %p145 = por %p143, %p144
    %p146 = scmp.ne.s32.totalorder %s134, %s135
    %p147 = scmp.eq.s32.totalorder %s26, 1
    %p148 = por %p146, %p147
    %p150 = scmp.ne.s32.totalorder %s135, %s149
    %p151 = scmp.eq.s32.totalorder %s26, 0
    %p152 = por %p150, %p151
    %s154 = sadd.s32 %s153, 1
    %p157 = scmp.eq.s32.totalorder %s20, 1
    %p158 = scmp.ne.s32.totalorder %s153, %s155
    %p159 = scmp.eq.s32.totalorder %s20, 0
    %p160 = por %p158, %p159
    %p161 = scmp.ne.s32.totalorder %s153, %s155
    %p162 = scmp.eq.s32.totalorder %s25, 1
    %p163 = por %p161, %p162
    %p164 = scmp.ne.s32.totalorder %s155, %s156
    %p165 = scmp.eq.s32.totalorder %s25, 0
    %p166 = por %p164, %p165
    %p167 = scmp.ne.s32.totalorder %s155, %s156
    %p168 = scmp.eq.s32.totalorder %s26, 1
    %p169 = por %p167, %p168
    %p171 = scmp.ne.s32.totalorder %s156, %s170
    %p172 = scmp.eq.s32.totalorder %s26, 0
    %p173 = por %p171, %p172
    %s175 = sadd.s32 %s174, 1
    %p178 = scmp.eq.s32.totalorder %s20, 1
    %p179 = scmp.ne.s32.totalorder %s174, %s176
    %p180 = scmp.eq.s32.totalorder %s20, 0
    %p181 = por %p179, %p180
    %p182 = scmp.ne.s32.totalorder %s174, %s176
    %p183 = scmp.eq.s32.totalorder %s25, 1
    %p184 = por %p182, %p183
    %p185 = scmp.ne.s32.totalorder %s176, %s177
    %p186 = scmp.eq.s32.totalorder %s25, 0
    %p187 = por %p185, %p186
    %p188 = scmp.ne.s32.totalorder %s176, %s177
    %p189 = scmp.eq.s32.totalorder %s26, 1
    %p190 = por %p188, %p189
    %p192 = scmp.ne.s32.totalorder %s177, %s191
    %p193 = scmp.eq.s32.totalorder %s26, 0
    %p194 = por %p192, %p193
    %s196 = sadd.s32 %s195, 1
    %p199 = scmp.eq.s32.totalorder %s20, 1
    %p200 = scmp.ne.s32.totalorder %s195, %s197
    %p201 = scmp.eq.s32.totalorder %s20, 0
    %p202 = por %p200, %p201
    %p203 = scmp.ne.s32.totalorder %s195, %s197
    %p204 = scmp.eq.s32.totalorder %s25, 1
    %p205 = por %p203, %p204
    %p206 = scmp.ne.s32.totalorder %s197, %s198
    %p207 = scmp.eq.s32.totalorder %s25, 0
    %p208 = por %p206, %p207
    %p209 = scmp.ne.s32.totalorder %s197, %s198
    %p210 = scmp.eq.s32.totalorder %s26, 1
    %p211 = por %p209, %p210
    %p213 = scmp.ne.s32.totalorder %s198, %s212
    %p214 = scmp.eq.s32.totalorder %s26, 0
    %p215 = por %p213, %p214
    %s217 = sadd.s32 %s216, 1
    %p220 = scmp.eq.s32.totalorder %s20, 1
    %p221 = scmp.ne.s32.totalorder %s216, %s218
    %p222 = scmp.eq.s32.totalorder %s20, 0
    %p223 = por %p221, %p222
    %p224 = scmp.ne.s32.totalorder %s216, %s218
    %p225 = scmp.eq.s32.totalorder %s25, 1
    %p226 = por %p224, %p225
    %p227 = scmp.ne.s32.totalorder %s218, %s219
    %p228 = scmp.eq.s32.totalorder %s25, 0
    %p229 = por %p227, %p228
    %p230 = scmp.ne.s32.totalorder %s218, %s219
    %p231 = scmp.eq.s32.totalorder %s26, 1
    %p232 = por %p230, %p231
    %p234 = scmp.ne.s32.totalorder %s219, %s233
    %p235 = scmp.eq.s32.totalorder %s26, 0
    %p236 = por %p234, %p235
    %s238 = sadd.s32 %s237, 1
    %p241 = scmp.eq.s32.totalorder %s20, 1
    %p242 = scmp.ne.s32.totalorder %s237, %s239
    %p243 = scmp.eq.s32.totalorder %s20, 0
    %p244 = por %p242, %p243
    %p245 = scmp.ne.s32.totalorder %s237, %s239
    %p246 = scmp.eq.s32.totalorder %s25, 1
    %p247 = por %p245, %p246
    %p248 = scmp.ne.s32.totalorder %s239, %s240
    %p249 = scmp.eq.s32.totalorder %s25, 0
    %p250 = por %p248, %p249
    %p251 = scmp.ne.s32.totalorder %s239, %s240
    %p252 = scmp.eq.s32.totalorder %s26, 1
    %p253 = por %p251, %p252
    %p255 = scmp.ne.s32.totalorder %s240, %s254
    %p256 = scmp.eq.s32.totalorder %s26, 0
    %p257 = por %p255, %p256
    %s259 = sadd.s32 %s258, 1
    %p262 = scmp.eq.s32.totalorder %s20, 1
    %p263 = scmp.ne.s32.totalorder %s258, %s260
    %p264 = scmp.eq.s32.totalorder %s20, 0
    %p265 = por %p263, %p264
    %p266 = scmp.ne.s32.totalorder %s258, %s260
    %p267 = scmp.eq.s32.totalorder %s25, 1
    %p268 = por %p266, %p267
    %p269 = scmp.ne.s32.totalorder %s260, %s261
    %p270 = scmp.eq.s32.totalorder %s25, 0
    %p271 = por %p269, %p270
    %p272 = scmp.ne.s32.totalorder %s260, %s261
    %p273 = scmp.eq.s32.totalorder %s26, 1
    %p274 = por %p272, %p273
    %p276 = scmp.ne.s32.totalorder %s261, %s275
    %p277 = scmp.eq.s32.totalorder %s26, 0
    %p278 = por %p276, %p277
    %s280 = sadd.s32 %s279, 1
    %p283 = scmp.eq.s32.totalorder %s20, 1
    %p284 = scmp.ne.s32.totalorder %s279, %s281
    %p285 = scmp.eq.s32.totalorder %s20, 0
    %p286 = por %p284, %p285
    %p287 = scmp.ne.s32.totalorder %s279, %s281
    %p288 = scmp.eq.s32.totalorder %s25, 1
    %p289 = por %p287, %p288
    %p290 = scmp.ne.s32.totalorder %s281, %s282
    %p291 = scmp.eq.s32.totalorder %s25, 0
    %p292 = por %p290, %p291
    %p293 = scmp.ne.s32.totalorder %s281, %s282
    %p294 = scmp.eq.s32.totalorder %s26, 1
    %p295 = por %p293, %p294
    %p297 = scmp.ne.s32.totalorder %s282, %s296
    %p298 = scmp.eq.s32.totalorder %s26, 0
    %p299 = por %p297, %p298
    %s301 = sadd.s32 %s300, 1
    %p304 = scmp.eq.s32.totalorder %s20, 1
    %p305 = scmp.ne.s32.totalorder %s300, %s302
    %p306 = scmp.eq.s32.totalorder %s20, 0
    %p307 = por %p305, %p306
    %p308 = scmp.ne.s32.totalorder %s300, %s302
    %p309 = scmp.eq.s32.totalorder %s25, 1
    %p310 = por %p308, %p309
    %p311 = scmp.ne.s32.totalorder %s302, %s303
    %p312 = scmp.eq.s32.totalorder %s25, 0
    %p313 = por %p311, %p312
    %p314 = scmp.ne.s32.totalorder %s302, %s303
    %p315 = scmp.eq.s32.totalorder %s26, 1
    %p316 = por %p314, %p315
    %p318 = scmp.ne.s32.totalorder %s303, %s317
    %p319 = scmp.eq.s32.totalorder %s26, 0
    %p320 = por %p318, %p319
    %s322 = sadd.s32 %s321, 1
    %p325 = scmp.eq.s32.totalorder %s20, 1
    %p326 = scmp.ne.s32.totalorder %s321, %s323
    %p327 = scmp.eq.s32.totalorder %s20, 0
    %p328 = por %p326, %p327
    %p329 = scmp.ne.s32.totalorder %s321, %s323
    %p330 = scmp.eq.s32.totalorder %s25, 1
    %p331 = por %p329, %p330
    %p332 = scmp.ne.s32.totalorder %s323, %s324
    %p333 = scmp.eq.s32.totalorder %s25, 0
    %p334 = por %p332, %p333
    %p335 = scmp.ne.s32.totalorder %s323, %s324
    %p336 = scmp.eq.s32.totalorder %s26, 1
    %p337 = por %p335, %p336
    %p339 = scmp.ne.s32.totalorder %s324, %s338
    %p340 = scmp.eq.s32.totalorder %s26, 0
    %p341 = por %p339, %p340
    %s342 = ssub.s32 %s20, %s27
    %p343 = scmp.eq.s32.totalorder %s342, 0
    %s345 = sadd.s32 %s344, 1
    %s346 = scalar_select %p343, %s344, %s345
    %p349 = pneg %p343
    %p350 = scmp.eq.s32.totalorder %s20, 1
    %p351 = por %p349, %p350
    %p352 = scmp.ne.s32.totalorder %s344, %s347
    %p353 = scmp.eq.s32.totalorder %s20, 0
    %p354 = por %p352, %p353
    %p355 = scmp.ne.s32.totalorder %s344, %s347
    %p356 = scmp.eq.s32.totalorder %s25, 1
    %p357 = por %p355, %p356
    %p358 = scmp.ne.s32.totalorder %s347, %s348
    %p359 = scmp.eq.s32.totalorder %s25, 0
    %p360 = por %p358, %p359
    %p361 = scmp.ne.s32.totalorder %s347, %s348
    %p362 = scmp.eq.s32.totalorder %s26, 1
    %p363 = por %p361, %p362
    %p365 = scmp.ne.s32.totalorder %s348, %s364
    %p366 = scmp.eq.s32.totalorder %s26, 0
    %p367 = por %p365, %p366
    %p368 = scmp.le.s32.totalorder 1, %s20
    %p369 = scmp.lt.s32.totalorder %s20, 3
    %p370 = pnand %p368, %p369
    %p371 = pneg %p370
    // Predicated region
    $region9: #{sppblock_forward.1} parent=5 // pred_check
      _
    $region10: #{sppblock_forward.1} parent=5 // pred_check_branch
      %373 = sbr.rel (%p370) target = $region12
    $region11: #{sppblock_forward.1} parent=5 // pred_region
      %s374 = ssub.s32 %s20, 1
      // Predicated region
      $region13: #{sppblock_forward.1} parent=11 // pred_check
        %p375 = pneg %p145
      $region14: #{sppblock_forward.1} parent=11 // pred_check_branch
        %377 = sbr.rel (%p375) target = $region16
      $region15: #{sppblock_forward.1} parent=11 // pred_region
        _
      $region16: #{sppblock_forward.1} parent=11 // pred_fallthru
        _
      // Predicated region
      $region17: #{sppblock_forward.1} parent=11 // pred_check
        %p378 = pneg %p166
      $region18: #{sppblock_forward.1} parent=11 // pred_check_branch
        %380 = sbr.rel (%p378) target = $region20
      $region19: #{sppblock_forward.1} parent=11 // pred_region
        _
      $region20: #{sppblock_forward.1} parent=11 // pred_fallthru
        _
      // Predicated region
      $region21: #{sppblock_forward.1} parent=11 // pred_check
        %p381 = pneg %p187
      $region22: #{sppblock_forward.1} parent=11 // pred_check_branch
        %383 = sbr.rel (%p381) target = $region24
      $region23: #{sppblock_forward.1} parent=11 // pred_region
        _
      $region24: #{sppblock_forward.1} parent=11 // pred_fallthru
        _
      // Predicated region
      $region25: #{sppblock_forward.1} parent=11 // pred_check
        %p384 = pneg %p208
      $region26: #{sppblock_forward.1} parent=11 // pred_check_branch
        %386 = sbr.rel (%p384) target = $region28
      $region27: #{sppblock_forward.1} parent=11 // pred_region
        _
      $region28: #{sppblock_forward.1} parent=11 // pred_fallthru
        _
      // Predicated region
      $region29: #{sppblock_forward.1} parent=11 // pred_check
        %p387 = pneg %p229
      $region30: #{sppblock_forward.1} parent=11 // pred_check_branch
        %389 = sbr.rel (%p387) target = $region32
      $region31: #{sppblock_forward.1} parent=11 // pred_region
        _
      $region32: #{sppblock_forward.1} parent=11 // pred_fallthru
        _
      // Predicated region
      $region33: #{sppblock_forward.1} parent=11 // pred_check
        %p390 = pneg %p250
      $region34: #{sppblock_forward.1} parent=11 // pred_check_branch
        %392 = sbr.rel (%p390) target = $region36
      $region35: #{sppblock_forward.1} parent=11 // pred_region
        _
      $region36: #{sppblock_forward.1} parent=11 // pred_fallthru
        _
      // Predicated region
      $region37: #{sppblock_forward.1} parent=11 // pred_check
        %p393 = pneg %p271
      $region38: #{sppblock_forward.1} parent=11 // pred_check_branch
        %395 = sbr.rel (%p393) target = $region40
      $region39: #{sppblock_forward.1} parent=11 // pred_region
        _
      $region40: #{sppblock_forward.1} parent=11 // pred_fallthru
        _
      // Predicated region
      $region41: #{sppblock_forward.1} parent=11 // pred_check
        %p396 = pneg %p292
      $region42: #{sppblock_forward.1} parent=11 // pred_check_branch
        %398 = sbr.rel (%p396) target = $region44
      $region43: #{sppblock_forward.1} parent=11 // pred_region
        _
      $region44: #{sppblock_forward.1} parent=11 // pred_fallthru
        _
      // Predicated region
      $region45: #{sppblock_forward.1} parent=11 // pred_check
        %p399 = pneg %p313
      $region46: #{sppblock_forward.1} parent=11 // pred_check_branch
        %401 = sbr.rel (%p399) target = $region48
      $region47: #{sppblock_forward.1} parent=11 // pred_region
        _
      $region48: #{sppblock_forward.1} parent=11 // pred_fallthru
        _
      // Predicated region
      $region49: #{sppblock_forward.1} parent=11 // pred_check
        %p402 = pneg %p334
      $region50: #{sppblock_forward.1} parent=11 // pred_check_branch
        %404 = sbr.rel (%p402) target = $region52
      $region51: #{sppblock_forward.1} parent=11 // pred_region
        _
      $region52: #{sppblock_forward.1} parent=11 // pred_fallthru
        _
    $region12: #{sppblock_forward.1} parent=5 // pred_fallthru
      _
    %p405 = scmp.lt.s32.totalorder %s20, 2
    // Predicated region
    $region53: #{sppblock_forward.1} parent=5 // pred_check
      %p406 = pneg %p405
    $region54: #{sppblock_forward.1} parent=5 // pred_check_branch
      %408 = sbr.rel (%p406) target = $region56
    $region55: #{sppblock_forward.1} parent=5 // pred_region
      // Predicated region
      $region57: #{sppblock_forward.1} parent=55 // pred_check
        %p409 = pneg %p40
      $region58: #{sppblock_forward.1} parent=55 // pred_check_branch
        %411 = sbr.rel (%p409) target = $region60
      $region59: #{sppblock_forward.1} parent=55 // pred_region
        %p412 = scmp.lt.s32.totalorder %s20, 1
        %s413 = scalar_select %p412, %s20, 1
        %s414 = smul.addr %s413, 2
        %s415 = smul.addr %s414, 4
        %s416 = scalar_lea.vmem %s0, %s415
      $region60: #{sppblock_forward.1} parent=55 // pred_fallthru
        _
      // Predicated region
      $region61: #{sppblock_forward.1} parent=55 // pred_check
        %p417 = pneg %p66
      $region62: #{sppblock_forward.1} parent=55 // pred_check_branch
        %419 = sbr.rel (%p417) target = $region64
      $region63: #{sppblock_forward.1} parent=55 // pred_region
        %p420 = scmp.lt.s32.totalorder %s20, 1
        %s421 = scalar_select %p420, %s20, 1
        %s422 = smul.addr %s421, 4
        %s423 = scalar_lea.vmem %s1, %s422
      $region64: #{sppblock_forward.1} parent=55 // pred_fallthru
        _
      // Predicated region
      $region65: #{sppblock_forward.1} parent=55 // pred_check
        %p424 = pneg %p92
      $region66: #{sppblock_forward.1} parent=55 // pred_check_branch
        %426 = sbr.rel (%p424) target = $region68
      $region67: #{sppblock_forward.1} parent=55 // pred_region
        %p427 = scmp.lt.s32.totalorder %s20, 1
        %s428 = scalar_select %p427, %s20, 1
        %s429 = smul.addr %s428, 4
        %s430 = scalar_lea.vmem %s2, %s429
      $region68: #{sppblock_forward.1} parent=55 // pred_fallthru
        _
      // Predicated region
      $region69: #{sppblock_forward.1} parent=55 // pred_check
        %p431 = pneg %p118
      $region70: #{sppblock_forward.1} parent=55 // pred_check_branch
        %433 = sbr.rel (%p431) target = $region72
      $region71: #{sppblock_forward.1} parent=55 // pred_region
        %p434 = scmp.lt.s32.totalorder %s20, 1
        %s435 = scalar_select %p434, %s20, 1
        %s436 = smul.addr %s435, 5
        %s437 = smul.addr %s436, 8
        %s438 = scalar_lea.vmem %s3, %s437
      $region72: #{sppblock_forward.1} parent=55 // pred_fallthru
        _
    $region56: #{sppblock_forward.1} parent=5 // pred_fallthru
      _
    %p439 = scmp.le.s32.totalorder 1, %s20
    %p440 = scmp.lt.s32.totalorder %s20, 3
    %p441 = pnand %p439, %p440
    %p442 = pneg %p441
    // Predicated region
    $region73: #{sppblock_forward.1} parent=5 // pred_check
      _
    $region74: #{sppblock_forward.1} parent=5 // pred_check_branch
      %444 = sbr.rel (%p441) target = $region76
    $region75: #{sppblock_forward.1} parent=5 // pred_region
      %s445 = ssub.s32 %s20, 1
      %p446 = scmp.lt.s32.totalorder %s25, 1
      %s447 = scalar_select %p446, %s25, 1
      %s448 = smul.addr %s447, 2
      %s449 = smul.addr %s448, 4
      %s450 = scalar_lea.vmem %s0, %s449
      %p451 = pneg %p46
      %p452 = pneg %p43
      %p453 = scmp.lt.s32.totalorder %s25, 1
      %s454 = scalar_select %p453, %s25, 1
      %s455 = smul.addr %s454, 4
      %s456 = scalar_lea.vmem %s1, %s455
      %p457 = pneg %p72
      %p458 = pneg %p69
      %p459 = scmp.lt.s32.totalorder %s25, 1
      %s460 = scalar_select %p459, %s25, 1
      %s461 = smul.addr %s460, 4
      %s462 = scalar_lea.vmem %s2, %s461
      %p463 = pneg %p98
      %p464 = pneg %p95
      %p465 = scmp.lt.s32.totalorder %s25, 1
      %s466 = scalar_select %p465, %s25, 1
      %s467 = smul.addr %s466, 5
      %s468 = smul.addr %s467, 8
      %s469 = scalar_lea.vmem %s3, %s468
      %p470 = pneg %p124
      %p471 = pneg %p121
      %p472 = pneg %p145
      %p473 = pneg %p142
      %p474 = pneg %p166
      %p475 = pneg %p163
      %p476 = pneg %p187
      %p477 = pneg %p184
      %p478 = pneg %p208
      %p479 = pneg %p205
      %p480 = pneg %p229
      %p481 = pneg %p226
      %p482 = pneg %p250
      %p483 = pneg %p247
      %p484 = pneg %p271
      %p485 = pneg %p268
      %p486 = pneg %p292
      %p487 = pneg %p289
      %p488 = pneg %p313
      %p489 = pneg %p310
      %p490 = pneg %p334
      %p491 = pneg %p331
      %p492 = pneg %p360
      %p493 = pneg %p357
      %p494 = scmp.lt.s32.totalorder %s25, 1
      %s495 = scalar_select %p494, %s25, 1
      %s496 = smul.addr %s495, 5
      %s497 = smul.addr %s496, 8
      %s498 = scalar_lea.vmem %s14, %s497
      %p499 = scmp.lt.s32.totalorder %s25, 1
      %s500 = scalar_select %p499, %s25, 1
      %s501 = smul.addr %s500, 2
      %s502 = smul.addr %s501, 4
      %s503 = scalar_lea.vmem %s0, %s502
      %p504 = scmp.lt.s32.totalorder %s25, 1
      %s505 = scalar_select %p504, %s25, 1
      %s506 = smul.addr %s505, 4
      %s507 = scalar_lea.vmem %s1, %s506
      %p508 = scmp.lt.s32.totalorder %s25, 1
      %s509 = scalar_select %p508, %s25, 1
      %s510 = smul.addr %s509, 4
      %s511 = scalar_lea.vmem %s2, %s510
      %p512 = scmp.lt.s32.totalorder %s25, 1
      %s513 = scalar_select %p512, %s25, 1
      %s514 = smul.addr %s513, 5
      %s515 = smul.addr %s514, 8
      %s516 = scalar_lea.vmem %s3, %s515
      %p517 = scmp.lt.s32.totalorder %s25, 1
      %s518 = scalar_select %p517, %s25, 1
      %s519 = smul.addr %s518, 5
      %s520 = smul.addr %s519, 8
      %s521 = scalar_lea.vmem %s14, %s520
      %v523 = vld [vmem:[%s4] sm:$0xf]
      %v524 = vld [vmem:[%s503] sm:$0xff]
      %v525 = vld [vmem:[%s507] sm:$0xf]
      %v526 = vld [vmem:[%s511] sm:$0xf]
      %v527 = vld [vmem:[%s516] sm:$0xff]
      %v528 = vld [vmem:[%s516 + $0x8] sm:$0xff]
      %v529 = vld [vmem:[%s516 + $0x10] sm:$0xff]
      %v530 = vld [vmem:[%s516 + $0x18] sm:$0xff]
      %v531 = vld [vmem:[%s516 + $0x20] sm:$0xff]
      %v532 = vld [vmem:[%s8] sm:$0x3]
      %v534 = vlaneseq
      %v535 = vshrl.u32 %v534, 7
      %v536 = vsub.s32 0, %v535
      %v537 = vrot.slane %v532, %v536
      %v538 = vlaneseq
      %v539 = vshrl.u32 %v538, 7
      %v540 = vsub.s32 1, %v539
      %v541 = vrot.slane %v532, %v540
      %v542 = vcombine.low %v537, %v541
      %v544 = vmul.f32 %v524, %v542
      %v546 = vcombine.high %v544, %v544
      %vm548 = vcmask 1043456
      %v549 = vsel %vm548, %v544, 0.0
      %vm550 = vcmask 125952
      %v551 = vsel %vm550, %v546, 0.0
      %v552 = vadd.f32 %v549, %v551
      %553 = vadd.xlane.f32.xlu0 %v552
      %v554 = vpop.xlane.xlu0 %553
      %vm555 = vcmask 31744
      %v557 = vsel %vm555, %v523, 0
      %v560 = vsel %vm548, %v554, 0
      %562 = vmatprep.subr.mxu0 0.0
      %563 = vmatpush1.msra.mxu0 %v560
      %564 = vmatprep.subr.mxu0 0.0
      %565 = vmatpush1.msra.mxu0 0.0
      %566 = vmatprep.subr.mxu0 0.0
      %567 = vmatpush1.msra.mxu0 0.0
      %568 = vmatprep.subr.mxu0 0.0
      %569 = vmatpush1.msra.mxu0 0.0
      %570 = vmatprep.subr.mxu0 0.0
      %571 = vmatpush1.msra.mxu0 0.0
      %572 = vmatprep.subr.mxu0 0.0
      %573 = vmatpush1.msra.mxu0 0.0
      %574 = vmatprep.subr.mxu0 0.0
      %575 = vmatpush1.msra.mxu0 0.0
      %576 = vmatprep.subr.mxu0 0.0
      %577 = vmatpush1.msra.mxu0 0.0
      %578 = vmatprep.subr.mxu0 0.0
      %579 = vmatpush1.msra.mxu0 0.0
      %580 = vmatprep.subr.mxu0 0.0
      %581 = vmatpush1.msra.mxu0 0.0
      %582 = vmatprep.subr.mxu0 0.0
      %583 = vmatpush1.msra.mxu0 0.0
      %584 = vmatprep.subr.mxu0 0.0
      %585 = vmatpush1.msra.mxu0 0.0
      %586 = vmatprep.subr.mxu0 0.0
      %587 = vmatpush1.msra.mxu0 0.0
      %588 = vmatprep.subr.mxu0 0.0
      %589 = vmatpush1.msra.mxu0 0.0
      %590 = vmatprep.subr.mxu0 0.0
      %591 = vmatpush1.msra.mxu0 0.0
      %592 = vmatprep.subr.mxu0 0.0
      %593 = vmatpush1.msra.mxu0 0.0
      %594 = vmatprep.subr.mxu0 0.0
      %595 = vmatpush1.msra.mxu0 0.0
      %596 = vmatprep.subr.mxu0 0.0
      %597 = vmatpush1.msra.mxu0 0.0
      %598 = vmatprep.subr.mxu0 0.0
      %599 = vmatpush1.msra.mxu0 0.0
      %600 = vmatprep.subr.mxu0 0.0
      %601 = vmatpush1.msra.mxu0 0.0
      %602 = vmatprep.subr.mxu0 0.0
      %603 = vmatpush1.msra.mxu0 0.0
      %604 = vmatprep.subr.mxu0 0.0
      %605 = vmatpush1.msra.mxu0 0.0
      %606 = vmatprep.subr.mxu0 0.0
      %607 = vmatpush1.msra.mxu0 0.0
      %608 = vmatprep.subr.mxu0 0.0
      %609 = vmatpush1.msra.mxu0 0.0
      %610 = vmatprep.subr.mxu0 0.0
      %611 = vmatpush1.msra.mxu0 0.0
      %612 = vmatprep.subr.mxu0 0.0
      %613 = vmatpush1.msra.mxu0 0.0
      %614 = vmatprep.subr.mxu0 0.0
      %615 = vmatpush1.msra.mxu0 0.0
      %616 = vmatprep.subr.mxu0 0.0
      %617 = vmatpush1.msra.mxu0 0.0
      %618 = vmatprep.subr.mxu0 0.0
      %619 = vmatpush1.msra.mxu0 0.0
      %620 = vmatprep.subr.mxu0 0.0
      %621 = vmatpush1.msra.mxu0 0.0
      %622 = vmatprep.subr.mxu0 0.0
      %623 = vmatpush1.msra.mxu0 0.0
      %624 = vmatprep.subr.mxu0 0.0
      %625 = vmatpush1.msra.mxu0 0.0
      %626 = vmatprep.mubr.f32.mxu0 0.0
      %627 = vmatmul.mubr.f32.gmra.mrb[0].mxu0 %v557
      %v628 = vpop.f32.mrb[0].mxu0
      %v629 = vadd.f32 0.0, %v628
      %v630 = vpop.f32.mrb[0].mxu0
      %631 = vdwg.mxu0
      %v632 = vld [vmem:[%s9] sm:$0x1]
      %v634 = vlaneseq
      %v635 = vshrl.u32 %v634, 7
      %v636 = vsub.s32 0, %v635
      %v637 = vrot.slane %v632, %v636
      %v639 = vmul.f32 %v525, %v637
      %vm640 = vcmask 519168
      %v641 = vsel %vm640, %v639, 0.0
      %642 = vadd.xlane.f32.xlu0 %v641
      %v643 = vpop.xlane.xlu0 %642
      %v645 = vsel %vm548, %v643, 0
      %647 = vmatprep.subr.mxu0 0.0
      %648 = vmatpush1.msra.mxu0 %v645
      %649 = vmatprep.subr.mxu0 0.0
      %650 = vmatpush1.msra.mxu0 0.0
      %651 = vmatprep.subr.mxu0 0.0
      %652 = vmatpush1.msra.mxu0 0.0
      %653 = vmatprep.subr.mxu0 0.0
      %654 = vmatpush1.msra.mxu0 0.0
      %655 = vmatprep.subr.mxu0 0.0
      %656 = vmatpush1.msra.mxu0 0.0
      %657 = vmatprep.subr.mxu0 0.0
      %658 = vmatpush1.msra.mxu0 0.0
      %659 = vmatprep.subr.mxu0 0.0
      %660 = vmatpush1.msra.mxu0 0.0
      %661 = vmatprep.subr.mxu0 0.0
      %662 = vmatpush1.msra.mxu0 0.0
      %663 = vmatprep.subr.mxu0 0.0
      %664 = vmatpush1.msra.mxu0 0.0
      %665 = vmatprep.subr.mxu0 0.0
      %666 = vmatpush1.msra.mxu0 0.0
      %667 = vmatprep.subr.mxu0 0.0
      %668 = vmatpush1.msra.mxu0 0.0
      %669 = vmatprep.subr.mxu0 0.0
      %670 = vmatpush1.msra.mxu0 0.0
      %671 = vmatprep.subr.mxu0 0.0
      %672 = vmatpush1.msra.mxu0 0.0
      %673 = vmatprep.subr.mxu0 0.0
      %674 = vmatpush1.msra.mxu0 0.0
      %675 = vmatprep.subr.mxu0 0.0
      %676 = vmatpush1.msra.mxu0 0.0
      %677 = vmatprep.subr.mxu0 0.0
      %678 = vmatpush1.msra.mxu0 0.0
      %679 = vmatprep.subr.mxu0 0.0
      %680 = vmatpush1.msra.mxu0 0.0
      %681 = vmatprep.subr.mxu0 0.0
      %682 = vmatpush1.msra.mxu0 0.0
      %683 = vmatprep.subr.mxu0 0.0
      %684 = vmatpush1.msra.mxu0 0.0
      %685 = vmatprep.subr.mxu0 0.0
      %686 = vmatpush1.msra.mxu0 0.0
      %687 = vmatprep.subr.mxu0 0.0
      %688 = vmatpush1.msra.mxu0 0.0
      %689 = vmatprep.subr.mxu0 0.0
      %690 = vmatpush1.msra.mxu0 0.0
      %691 = vmatprep.subr.mxu0 0.0
      %692 = vmatpush1.msra.mxu0 0.0
      %693 = vmatprep.subr.mxu0 0.0
      %694 = vmatpush1.msra.mxu0 0.0
      %695 = vmatprep.subr.mxu0 0.0
      %696 = vmatpush1.msra.mxu0 0.0
      %697 = vmatprep.subr.mxu0 0.0
      %698 = vmatpush1.msra.mxu0 0.0
      %699 = vmatprep.subr.mxu0 0.0
      %700 = vmatpush1.msra.mxu0 0.0
      %701 = vmatprep.subr.mxu0 0.0
      %702 = vmatpush1.msra.mxu0 0.0
      %703 = vmatprep.subr.mxu0 0.0
      %704 = vmatpush1.msra.mxu0 0.0
      %705 = vmatprep.subr.mxu0 0.0
      %706 = vmatpush1.msra.mxu0 0.0
      %707 = vmatprep.subr.mxu0 0.0
      %708 = vmatpush1.msra.mxu0 0.0
      %709 = vmatprep.subr.mxu0 0.0
      %710 = vmatpush1.msra.mxu0 0.0
      %711 = vmatprep.mubr.f32.mxu0 0.0
      %712 = vmatmul.mubr.f32.gmra.mrb[0].mxu0 %v557
      %v713 = vpop.f32.mrb[0].mxu0
      %v714 = vadd.f32 0.0, %v713
      %v715 = vpop.f32.mrb[0].mxu0
      %716 = vdwg.mxu0
      %v717 = vld [vmem:[%s10] sm:$0x1]
      %v719 = vlaneseq
      %v720 = vshrl.u32 %v719, 7
      %v721 = vsub.s32 0, %v720
      %v722 = vrot.slane %v717, %v721
      %v724 = vmul.f32 %v526, %v722
      %v725 = vsel %vm550, %v724, 0.0
      %726 = vadd.xlane.f32.xlu0 %v725
      %v727 = vpop.xlane.xlu0 %726
      %v729 = vsel %vm548, %v727, 0
      %731 = vmatprep.subr.mxu0 0.0
      %732 = vmatpush1.msra.mxu0 %v729
      %733 = vmatprep.subr.mxu0 0.0
      %734 = vmatpush1.msra.mxu0 0.0
      %735 = vmatprep.subr.mxu0 0.0
      %736 = vmatpush1.msra.mxu0 0.0
      %737 = vmatprep.subr.mxu0 0.0
      %738 = vmatpush1.msra.mxu0 0.0
      %739 = vmatprep.subr.mxu0 0.0
      %740 = vmatpush1.msra.mxu0 0.0
      %741 = vmatprep.subr.mxu0 0.0
      %742 = vmatpush1.msra.mxu0 0.0
      %743 = vmatprep.subr.mxu0 0.0
      %744 = vmatpush1.msra.mxu0 0.0
      %745 = vmatprep.subr.mxu0 0.0
      %746 = vmatpush1.msra.mxu0 0.0
      %747 = vmatprep.subr.mxu0 0.0
      %748 = vmatpush1.msra.mxu0 0.0
      %749 = vmatprep.subr.mxu0 0.0
      %750 = vmatpush1.msra.mxu0 0.0
      %751 = vmatprep.subr.mxu0 0.0
      %752 = vmatpush1.msra.mxu0 0.0
      %753 = vmatprep.subr.mxu0 0.0
      %754 = vmatpush1.msra.mxu0 0.0
      %755 = vmatprep.subr.mxu0 0.0
      %756 = vmatpush1.msra.mxu0 0.0
      %757 = vmatprep.subr.mxu0 0.0
      %758 = vmatpush1.msra.mxu0 0.0
      %759 = vmatprep.subr.mxu0 0.0
      %760 = vmatpush1.msra.mxu0 0.0
      %761 = vmatprep.subr.mxu0 0.0
      %762 = vmatpush1.msra.mxu0 0.0
      %763 = vmatprep.subr.mxu0 0.0
      %764 = vmatpush1.msra.mxu0 0.0
      %765 = vmatprep.subr.mxu0 0.0
      %766 = vmatpush1.msra.mxu0 0.0
      %767 = vmatprep.subr.mxu0 0.0
      %768 = vmatpush1.msra.mxu0 0.0
      %769 = vmatprep.subr.mxu0 0.0
      %770 = vmatpush1.msra.mxu0 0.0
      %771 = vmatprep.subr.mxu0 0.0
      %772 = vmatpush1.msra.mxu0 0.0
      %773 = vmatprep.subr.mxu0 0.0
      %774 = vmatpush1.msra.mxu0 0.0
      %775 = vmatprep.subr.mxu0 0.0
      %776 = vmatpush1.msra.mxu0 0.0
      %777 = vmatprep.subr.mxu0 0.0
      %778 = vmatpush1.msra.mxu0 0.0
      %779 = vmatprep.subr.mxu0 0.0
      %780 = vmatpush1.msra.mxu0 0.0
      %781 = vmatprep.subr.mxu0 0.0
      %782 = vmatpush1.msra.mxu0 0.0
      %783 = vmatprep.subr.mxu0 0.0
      %784 = vmatpush1.msra.mxu0 0.0
      %785 = vmatprep.subr.mxu0 0.0
      %786 = vmatpush1.msra.mxu0 0.0
      %787 = vmatprep.subr.mxu0 0.0
      %788 = vmatpush1.msra.mxu0 0.0
      %789 = vmatprep.subr.mxu0 0.0
      %790 = vmatpush1.msra.mxu0 0.0
      %791 = vmatprep.subr.mxu0 0.0
      %792 = vmatpush1.msra.mxu0 0.0
      %793 = vmatprep.subr.mxu0 0.0
      %794 = vmatpush1.msra.mxu0 0.0
      %795 = vmatprep.mubr.f32.mxu0 0.0
      %796 = vmatmul.mubr.f32.gmra.mrb[0].mxu0 %v557
      %v797 = vpop.f32.mrb[0].mxu0
      %v798 = vadd.f32 0.0, %v797
      %v799 = vpop.f32.mrb[0].mxu0
      %800 = vdwg.mxu0
      %v801 = vadd.f32 %v527, %v528
      %v802 = vadd.f32 %v801, %v529
      %v803 = vadd.f32 %v802, %v530
      %vm804 = vcmask 523264
      %v805 = vsel %vm804, %v531, 0.0
      %v806 = vadd.f32 %v803, %v805
      %807 = vadd.xlane.f32.xlu0 %v806
      %v808 = vpop.xlane.xlu0 %807
      %v809 = vmul.f32 %v808, 0.0017361111
      %v810 = vld [vmem:[%s11] sm:$0x1]
      %v812 = vlaneseq
      %v813 = vshrl.u32 %v812, 7
      %v814 = vsub.s32 0, %v813
      %v815 = vrot.slane %v810, %v814
      %816 = vrot.lane.b32.xlu0 %v815, 124
      %v817 = vpop.permute.xlu0 %816
      %v818 = vsel %vm555, %v817, 0
      %v821 = vsel %vm548, %v714, 0
      %823 = vmatprep.subr.mxu0 0.0
      %824 = vmatpush1.msra.mxu0 %v821
      %825 = vmatprep.subr.mxu0 0.0
      %826 = vmatpush1.msra.mxu0 0.0
      %827 = vmatprep.subr.mxu0 0.0
      %828 = vmatpush1.msra.mxu0 0.0
      %829 = vmatprep.subr.mxu0 0.0
      %830 = vmatpush1.msra.mxu0 0.0
      %831 = vmatprep.subr.mxu0 0.0
      %832 = vmatpush1.msra.mxu0 0.0
      %833 = vmatprep.subr.mxu0 0.0
      %834 = vmatpush1.msra.mxu0 0.0
      %835 = vmatprep.subr.mxu0 0.0
      %836 = vmatpush1.msra.mxu0 0.0
      %837 = vmatprep.subr.mxu0 0.0
      %838 = vmatpush1.msra.mxu0 0.0
      %839 = vmatprep.subr.mxu0 0.0
      %840 = vmatpush1.msra.mxu0 0.0
      %841 = vmatprep.subr.mxu0 0.0
      %842 = vmatpush1.msra.mxu0 0.0
      %843 = vmatprep.subr.mxu0 0.0
      %844 = vmatpush1.msra.mxu0 0.0
      %845 = vmatprep.subr.mxu0 0.0
      %846 = vmatpush1.msra.mxu0 0.0
      %847 = vmatprep.subr.mxu0 0.0
      %848 = vmatpush1.msra.mxu0 0.0
      %849 = vmatprep.subr.mxu0 0.0
      %850 = vmatpush1.msra.mxu0 0.0
      %851 = vmatprep.subr.mxu0 0.0
      %852 = vmatpush1.msra.mxu0 0.0
      %853 = vmatprep.subr.mxu0 0.0
      %854 = vmatpush1.msra.mxu0 0.0
      %855 = vmatprep.subr.mxu0 0.0
      %856 = vmatpush1.msra.mxu0 0.0
      %857 = vmatprep.subr.mxu0 0.0
      %858 = vmatpush1.msra.mxu0 0.0
      %859 = vmatprep.subr.mxu0 0.0
      %860 = vmatpush1.msra.mxu0 0.0
      %861 = vmatprep.subr.mxu0 0.0
      %862 = vmatpush1.msra.mxu0 0.0
      %863 = vmatprep.subr.mxu0 0.0
      %864 = vmatpush1.msra.mxu0 0.0
      %865 = vmatprep.subr.mxu0 0.0
      %866 = vmatpush1.msra.mxu0 0.0
      %867 = vmatprep.subr.mxu0 0.0
      %868 = vmatpush1.msra.mxu0 0.0
      %869 = vmatprep.subr.mxu0 0.0
      %870 = vmatpush1.msra.mxu0 0.0
      %871 = vmatprep.subr.mxu0 0.0
      %872 = vmatpush1.msra.mxu0 0.0
      %873 = vmatprep.subr.mxu0 0.0
      %874 = vmatpush1.msra.mxu0 0.0
      %875 = vmatprep.subr.mxu0 0.0
      %876 = vmatpush1.msra.mxu0 0.0
      %877 = vmatprep.subr.mxu0 0.0
      %878 = vmatpush1.msra.mxu0 0.0
      %879 = vmatprep.subr.mxu0 0.0
      %880 = vmatpush1.msra.mxu0 0.0
      %881 = vmatprep.subr.mxu0 0.0
      %882 = vmatpush1.msra.mxu0 0.0
      %883 = vmatprep.subr.mxu0 0.0
      %884 = vmatpush1.msra.mxu0 0.0
      %885 = vmatprep.subr.mxu0 0.0
      %886 = vmatpush1.msra.mxu0 0.0
      %887 = vmatprep.mubr.f32.mxu0 0.0
      %888 = vmatmul.mubr.f32.gmra.mrb[0].mxu0 %v818
      %v889 = vpop.f32.mrb[0].mxu0
      %v890 = vadd.f32 0.0, %v889
      %v891 = vpop.f32.mrb[0].mxu0
      %892 = vdwg.mxu0
      %v893 = vsel %vm555, %v810, 0
      %v896 = vsel %vm548, %v629, 0
      %898 = vmatprep.subr.mxu0 0.0
      %899 = vmatpush1.msra.mxu0 %v896
      %900 = vmatprep.subr.mxu0 0.0
      %901 = vmatpush1.msra.mxu0 0.0
      %902 = vmatprep.subr.mxu0 0.0
      %903 = vmatpush1.msra.mxu0 0.0
      %904 = vmatprep.subr.mxu0 0.0
      %905 = vmatpush1.msra.mxu0 0.0
      %906 = vmatprep.subr.mxu0 0.0
      %907 = vmatpush1.msra.mxu0 0.0
      %908 = vmatprep.subr.mxu0 0.0
      %909 = vmatpush1.msra.mxu0 0.0
      %910 = vmatprep.subr.mxu0 0.0
      %911 = vmatpush1.msra.mxu0 0.0
      %912 = vmatprep.subr.mxu0 0.0
      %913 = vmatpush1.msra.mxu0 0.0
      %914 = vmatprep.subr.mxu0 0.0
      %915 = vmatpush1.msra.mxu0 0.0
      %916 = vmatprep.subr.mxu0 0.0
      %917 = vmatpush1.msra.mxu0 0.0
      %918 = vmatprep.subr.mxu0 0.0
      %919 = vmatpush1.msra.mxu0 0.0
      %920 = vmatprep.subr.mxu0 0.0
      %921 = vmatpush1.msra.mxu0 0.0
      %922 = vmatprep.subr.mxu0 0.0
      %923 = vmatpush1.msra.mxu0 0.0
      %924 = vmatprep.subr.mxu0 0.0
      %925 = vmatpush1.msra.mxu0 0.0
      %926 = vmatprep.subr.mxu0 0.0
      %927 = vmatpush1.msra.mxu0 0.0
      %928 = vmatprep.subr.mxu0 0.0
      %929 = vmatpush1.msra.mxu0 0.0
      %930 = vmatprep.subr.mxu0 0.0
      %931 = vmatpush1.msra.mxu0 0.0
      %932 = vmatprep.subr.mxu0 0.0
      %933 = vmatpush1.msra.mxu0 0.0
      %934 = vmatprep.subr.mxu0 0.0
      %935 = vmatpush1.msra.mxu0 0.0
      %936 = vmatprep.subr.mxu0 0.0
      %937 = vmatpush1.msra.mxu0 0.0
      %938 = vmatprep.subr.mxu0 0.0
      %939 = vmatpush1.msra.mxu0 0.0
      %940 = vmatprep.subr.mxu0 0.0
      %941 = vmatpush1.msra.mxu0 0.0
      %942 = vmatprep.subr.mxu0 0.0
      %943 = vmatpush1.msra.mxu0 0.0
      %944 = vmatprep.subr.mxu0 0.0
      %945 = vmatpush1.msra.mxu0 0.0
      %946 = vmatprep.subr.mxu0 0.0
      %947 = vmatpush1.msra.mxu0 0.0
      %948 = vmatprep.subr.mxu0 0.0
      %949 = vmatpush1.msra.mxu0 0.0
      %950 = vmatprep.subr.mxu0 0.0
      %951 = vmatpush1.msra.mxu0 0.0
      %952 = vmatprep.subr.mxu0 0.0
      %953 = vmatpush1.msra.mxu0 0.0
      %954 = vmatprep.subr.mxu0 0.0
      %955 = vmatpush1.msra.mxu0 0.0
      %956 = vmatprep.subr.mxu0 0.0
      %957 = vmatpush1.msra.mxu0 0.0
      %958 = vmatprep.subr.mxu0 0.0
      %959 = vmatpush1.msra.mxu0 0.0
      %960 = vmatprep.subr.mxu0 0.0
      %961 = vmatpush1.msra.mxu0 0.0
      %962 = vmatprep.mubr.f32.mxu0 0.0
      %963 = vmatmul.mubr.f32.gmra.mrb[0].mxu0 %v893
      %v964 = vpop.f32.mrb[0].mxu0
      %v965 = vadd.f32 %v890, %v964
      %v966 = vpop.f32.mrb[0].mxu0
      %967 = vdwg.mxu0
      %968 = vrot.lane.b32.xlu0 %v815, 120
      %v969 = vpop.permute.xlu0 %968
      %v970 = vsel %vm555, %v969, 0
      %v973 = vsel %vm548, %v798, 0
      %975 = vmatprep.subr.mxu0 0.0
      %976 = vmatpush1.msra.mxu0 %v973
      %977 = vmatprep.subr.mxu0 0.0
      %978 = vmatpush1.msra.mxu0 0.0
      %979 = vmatprep.subr.mxu0 0.0
      %980 = vmatpush1.msra.mxu0 0.0
      %981 = vmatprep.subr.mxu0 0.0
      %982 = vmatpush1.msra.mxu0 0.0
      %983 = vmatprep.subr.mxu0 0.0
      %984 = vmatpush1.msra.mxu0 0.0
      %985 = vmatprep.subr.mxu0 0.0
      %986 = vmatpush1.msra.mxu0 0.0
      %987 = vmatprep.subr.mxu0 0.0
      %988 = vmatpush1.msra.mxu0 0.0
      %989 = vmatprep.subr.mxu0 0.0
      %990 = vmatpush1.msra.mxu0 0.0
      %991 = vmatprep.subr.mxu0 0.0
      %992 = vmatpush1.msra.mxu0 0.0
      %993 = vmatprep.subr.mxu0 0.0
      %994 = vmatpush1.msra.mxu0 0.0
      %995 = vmatprep.subr.mxu0 0.0
      %996 = vmatpush1.msra.mxu0 0.0
      %997 = vmatprep.subr.mxu0 0.0
      %998 = vmatpush1.msra.mxu0 0.0
      %999 = vmatprep.subr.mxu0 0.0
      %1000 = vmatpush1.msra.mxu0 0.0
      %1001 = vmatprep.subr.mxu0 0.0
      %1002 = vmatpush1.msra.mxu0 0.0
      %1003 = vmatprep.subr.mxu0 0.0
      %1004 = vmatpush1.msra.mxu0 0.0
      %1005 = vmatprep.subr.mxu0 0.0
      %1006 = vmatpush1.msra.mxu0 0.0
      %1007 = vmatprep.subr.mxu0 0.0
      %1008 = vmatpush1.msra.mxu0 0.0
      %1009 = vmatprep.subr.mxu0 0.0
      %1010 = vmatpush1.msra.mxu0 0.0
      %1011 = vmatprep.subr.mxu0 0.0
      %1012 = vmatpush1.msra.mxu0 0.0
      %1013 = vmatprep.subr.mxu0 0.0
      %1014 = vmatpush1.msra.mxu0 0.0
      %1015 = vmatprep.subr.mxu0 0.0
      %1016 = vmatpush1.msra.mxu0 0.0
      %1017 = vmatprep.subr.mxu0 0.0
      %1018 = vmatpush1.msra.mxu0 0.0
      %1019 = vmatprep.subr.mxu0 0.0
      %1020 = vmatpush1.msra.mxu0 0.0
      %1021 = vmatprep.subr.mxu0 0.0
      %1022 = vmatpush1.msra.mxu0 0.0
      %1023 = vmatprep.subr.mxu0 0.0
      %1024 = vmatpush1.msra.mxu0 0.0
      %1025 = vmatprep.subr.mxu0 0.0
      %1026 = vmatpush1.msra.mxu0 0.0
      %1027 = vmatprep.subr.mxu0 0.0
      %1028 = vmatpush1.msra.mxu0 0.0
      %1029 = vmatprep.subr.mxu0 0.0
      %1030 = vmatpush1.msra.mxu0 0.0
      %1031 = vmatprep.subr.mxu0 0.0
      %1032 = vmatpush1.msra.mxu0 0.0
      %1033 = vmatprep.subr.mxu0 0.0
      %1034 = vmatpush1.msra.mxu0 0.0
      %1035 = vmatprep.subr.mxu0 0.0
      %1036 = vmatpush1.msra.mxu0 0.0
      %1037 = vmatprep.subr.mxu0 0.0
      %1038 = vmatpush1.msra.mxu0 0.0
      %1039 = vmatprep.mubr.f32.mxu0 0.0
      %1040 = vmatmul.mubr.f32.gmra.mrb[0].mxu0 %v970
      %v1041 = vpop.f32.mrb[0].mxu0
      %v1042 = vadd.f32 0.0, %v1041
      %v1043 = vpop.f32.mrb[0].mxu0
      %1044 = vdwg.mxu0
      %v1045 = vadd.f32 %v965, %v1042
      %1046 = vrot.lane.b32.xlu0 %v815, 116
      %v1047 = vpop.permute.xlu0 %1046
      %vm1048 = vcmask 64512
      %v1049 = vsel %vm1048, %v1047, 0
      %1051 = vmatprep.subr.mxu0 0.0
      %1052 = vmatpush1.msra.mxu0 %v809
      %1053 = vmatprep.subr.mxu0 0.0
      %1054 = vmatpush1.msra.mxu0 0.0
      %1055 = vmatprep.subr.mxu0 0.0
      %1056 = vmatpush1.msra.mxu0 0.0
      %1057 = vmatprep.subr.mxu0 0.0
      %1058 = vmatpush1.msra.mxu0 0.0
      %1059 = vmatprep.subr.mxu0 0.0
      %1060 = vmatpush1.msra.mxu0 0.0
      %1061 = vmatprep.subr.mxu0 0.0
      %1062 = vmatpush1.msra.mxu0 0.0
      %1063 = vmatprep.subr.mxu0 0.0
      %1064 = vmatpush1.msra.mxu0 0.0
      %1065 = vmatprep.subr.mxu0 0.0
      %1066 = vmatpush1.msra.mxu0 0.0
      %1067 = vmatprep.subr.mxu0 0.0
      %1068 = vmatpush1.msra.mxu0 0.0
      %1069 = vmatprep.subr.mxu0 0.0
      %1070 = vmatpush1.msra.mxu0 0.0
      %1071 = vmatprep.subr.mxu0 0.0
      %1072 = vmatpush1.msra.mxu0 0.0
      %1073 = vmatprep.subr.mxu0 0.0
      %1074 = vmatpush1.msra.mxu0 0.0
      %1075 = vmatprep.subr.mxu0 0.0
      %1076 = vmatpush1.msra.mxu0 0.0
      %1077 = vmatprep.subr.mxu0 0.0
      %1078 = vmatpush1.msra.mxu0 0.0
      %1079 = vmatprep.subr.mxu0 0.0
      %1080 = vmatpush1.msra.mxu0 0.0
      %1081 = vmatprep.subr.mxu0 0.0
      %1082 = vmatpush1.msra.mxu0 0.0
      %1083 = vmatprep.subr.mxu0 0.0
      %1084 = vmatpush1.msra.mxu0 0.0
      %1085 = vmatprep.subr.mxu0 0.0
      %1086 = vmatpush1.msra.mxu0 0.0
      %1087 = vmatprep.subr.mxu0 0.0
      %1088 = vmatpush1.msra.mxu0 0.0
      %1089 = vmatprep.subr.mxu0 0.0
      %1090 = vmatpush1.msra.mxu0 0.0
      %1091 = vmatprep.subr.mxu0 0.0
      %1092 = vmatpush1.msra.mxu0 0.0
      %1093 = vmatprep.subr.mxu0 0.0
      %1094 = vmatpush1.msra.mxu0 0.0
      %1095 = vmatprep.subr.mxu0 0.0
      %1096 = vmatpush1.msra.mxu0 0.0
      %1097 = vmatprep.subr.mxu0 0.0
      %1098 = vmatpush1.msra.mxu0 0.0
      %1099 = vmatprep.subr.mxu0 0.0
      %1100 = vmatpush1.msra.mxu0 0.0
      %1101 = vmatprep.subr.mxu0 0.0
      %1102 = vmatpush1.msra.mxu0 0.0
      %1103 = vmatprep.subr.mxu0 0.0
      %1104 = vmatpush1.msra.mxu0 0.0
      %1105 = vmatprep.subr.mxu0 0.0
      %1106 = vmatpush1.msra.mxu0 0.0
      %1107 = vmatprep.subr.mxu0 0.0
      %1108 = vmatpush1.msra.mxu0 0.0
      %1109 = vmatprep.subr.mxu0 0.0
      %1110 = vmatpush1.msra.mxu0 0.0
      %1111 = vmatprep.subr.mxu0 0.0
      %1112 = vmatpush1.msra.mxu0 0.0
      %1113 = vmatprep.subr.mxu0 0.0
      %1114 = vmatpush1.msra.mxu0 0.0
      %1115 = vmatprep.mubr.f32.mxu0 0.0
      %1116 = vmatmul.mubr.f32.gmra.mrb[0].mxu0 %v1049
      %v1117 = vpop.f32.mrb[0].mxu0
      %v1118 = vadd.f32 0.0, %v1117
      %v1119 = vpop.f32.mrb[0].mxu0
      %1120 = vdwg.mxu0
      %v1121 = vadd.f32 %v1045, %v1118
      %v1122 = vmax.f32 %v1121, 0.0
      %v1123 = vld [vmem:[%s12] sm:$0xff]
      %v1124 = vld [vmem:[%s12 + $0x8] sm:$0xff]
      %v1125 = vld [vmem:[%s12 + $0x10] sm:$0xf]
      %vm1126 = vcmask 7168
      %v1128 = vsel %vm1126, %v1123, 0
      %v1131 = vsel %vm1126, %v1124, 0
      %v1134 = vsel %vm1126, %v1125, 0
      %vm1136 = vcmask 1040384
      %v1138 = vsel %vm1136, %v1122, 0
      %1140 = vmatprep.subr.mxu0 0.0
      %1141 = vmatpush1.msra.mxu0 %v1138
      %1142 = vmatprep.subr.mxu0 0.0
      %1143 = vmatpush1.msra.mxu0 0.0
      %1144 = vmatprep.subr.mxu0 0.0
      %1145 = vmatpush1.msra.mxu0 0.0
      %1146 = vmatprep.subr.mxu0 0.0
      %1147 = vmatpush1.msra.mxu0 0.0
      %1148 = vmatprep.subr.mxu0 0.0
      %1149 = vmatpush1.msra.mxu0 0.0
      %1150 = vmatprep.subr.mxu0 0.0
      %1151 = vmatpush1.msra.mxu0 0.0
      %1152 = vmatprep.subr.mxu0 0.0
      %1153 = vmatpush1.msra.mxu0 0.0
      %1154 = vmatprep.subr.mxu0 0.0
      %1155 = vmatpush1.msra.mxu0 0.0
      %1156 = vmatprep.subr.mxu0 0.0
      %1157 = vmatpush1.msra.mxu0 0.0
      %1158 = vmatprep.subr.mxu0 0.0
      %1159 = vmatpush1.msra.mxu0 0.0
      %1160 = vmatprep.subr.mxu0 0.0
      %1161 = vmatpush1.msra.mxu0 0.0
      %1162 = vmatprep.subr.mxu0 0.0
      %1163 = vmatpush1.msra.mxu0 0.0
      %1164 = vmatprep.subr.mxu0 0.0
      %1165 = vmatpush1.msra.mxu0 0.0
      %1166 = vmatprep.subr.mxu0 0.0
      %1167 = vmatpush1.msra.mxu0 0.0
      %1168 = vmatprep.subr.mxu0 0.0
      %1169 = vmatpush1.msra.mxu0 0.0
      %1170 = vmatprep.subr.mxu0 0.0
      %1171 = vmatpush1.msra.mxu0 0.0
      %1172 = vmatprep.subr.mxu0 0.0
      %1173 = vmatpush1.msra.mxu0 0.0
      %1174 = vmatprep.subr.mxu0 0.0
      %1175 = vmatpush1.msra.mxu0 0.0
      %1176 = vmatprep.subr.mxu0 0.0
      %1177 = vmatpush1.msra.mxu0 0.0
      %1178 = vmatprep.subr.mxu0 0.0
      %1179 = vmatpush1.msra.mxu0 0.0
      %1180 = vmatprep.subr.mxu0 0.0
      %1181 = vmatpush1.msra.mxu0 0.0
      %1182 = vmatprep.subr.mxu0 0.0
      %1183 = vmatpush1.msra.mxu0 0.0
      %1184 = vmatprep.subr.mxu0 0.0
      %1185 = vmatpush1.msra.mxu0 0.0
      %1186 = vmatprep.subr.mxu0 0.0
      %1187 = vmatpush1.msra.mxu0 0.0
      %1188 = vmatprep.subr.mxu0 0.0
      %1189 = vmatpush1.msra.mxu0 0.0
      %1190 = vmatprep.subr.mxu0 0.0
      %1191 = vmatpush1.msra.mxu0 0.0
      %1192 = vmatprep.subr.mxu0 0.0
      %1193 = vmatpush1.msra.mxu0 0.0
      %1194 = vmatprep.subr.mxu0 0.0
      %1195 = vmatpush1.msra.mxu0 0.0
      %1196 = vmatprep.subr.mxu0 0.0
      %1197 = vmatpush1.msra.mxu0 0.0
      %1198 = vmatprep.subr.mxu0 0.0
      %1199 = vmatpush1.msra.mxu0 0.0
      %1200 = vmatprep.subr.mxu0 0.0
      %1201 = vmatpush1.msra.mxu0 0.0
      %1202 = vmatprep.subr.mxu0 0.0
      %1203 = vmatpush1.msra.mxu0 0.0
      %1204 = vmatprep.mubr.f32.mxu0 0.0
      %1205 = vmatmul.mubr.f32.gmra.mrb[0].mxu0 %v1128
      %v1206 = vpop.f32.mrb[0].mxu0
      %v1207 = vadd.f32 0.0, %v1206
      %v1208 = vpop.f32.mrb[0].mxu0
      %1209 = vmatprep.mubr.f32.mxu0 0.0
      %1210 = vmatmul.mubr.f32.gmra.mrb[0].mxu0 %v1131
      %v1211 = vpop.f32.mrb[0].mxu0
      %v1212 = vadd.f32 0.0, %v1211
      %v1213 = vpop.f32.mrb[0].mxu0
      %1214 = vmatprep.mubr.f32.mxu0 0.0
      %1215 = vmatmul.mubr.f32.gmra.mrb[0].mxu0 %v1134
      %v1216 = vpop.f32.mrb[0].mxu0
      %v1217 = vadd.f32 0.0, %v1216
      %v1218 = vpop.f32.mrb[0].mxu0
      %1219 = vdwg.mxu0
      %v1220 = vsub.f32 0.0, %v1207
      %v1221 = vsub.f32 0.0, %v1212
      %v1222 = vsub.f32 0.0, %v1217
      %v1223 = vmul.f32 %v1220, 1.442695
      %v1224 = vpow.pop %v1223
      %v1225 = vmul.f32 %v1221, 1.442695
      %v1226 = vpow.pop %v1225
      %v1227 = vmul.f32 %v1222, 1.442695
      %v1228 = vpow.pop %v1227
      %v1229 = vadd.f32 %v1224, 1.0
      %v1230 = vadd.f32 %v1226, 1.0
      %v1231 = vadd.f32 %v1228, 1.0
      %v1232 = vrcp.pop %v1229
      %v1233 = vmul.f32 1.0, %v1232
      %v1234 = vrcp.pop %v1230
      %v1235 = vmul.f32 1.0, %v1234
      %v1236 = vrcp.pop %v1231
      %v1237 = vmul.f32 1.0, %v1236
      %v1238 = vld [vmem:[%s13] sm:$0xff]
      %1240 = vset.pattern.permute.xlu0 0
      %1241 = vperm.xlu0 %1240, %v1233
      %v1242 = vpop.permute.xlu0 %1241
      %v1244 = vmul.f32 %v523, %v1242
      %v1246 = vsel %vm555, %v1238, 0
      %v1249 = vsel %vm548, %v1244, 0
      %1251 = vmatprep.subr.mxu0 0.0
      %1252 = vmatpush1.msra.mxu0 %v1249
      %1253 = vmatprep.subr.mxu0 0.0
      %1254 = vmatpush1.msra.mxu0 0.0
      %1255 = vmatprep.subr.mxu0 0.0
      %1256 = vmatpush1.msra.mxu0 0.0
      %1257 = vmatprep.subr.mxu0 0.0
      %1258 = vmatpush1.msra.mxu0 0.0
      %1259 = vmatprep.subr.mxu0 0.0
      %1260 = vmatpush1.msra.mxu0 0.0
      %1261 = vmatprep.subr.mxu0 0.0
      %1262 = vmatpush1.msra.mxu0 0.0
      %1263 = vmatprep.subr.mxu0 0.0
      %1264 = vmatpush1.msra.mxu0 0.0
      %1265 = vmatprep.subr.mxu0 0.0
      %1266 = vmatpush1.msra.mxu0 0.0
      %1267 = vmatprep.subr.mxu0 0.0
      %1268 = vmatpush1.msra.mxu0 0.0
      %1269 = vmatprep.subr.mxu0 0.0
      %1270 = vmatpush1.msra.mxu0 0.0
      %1271 = vmatprep.subr.mxu0 0.0
      %1272 = vmatpush1.msra.mxu0 0.0
      %1273 = vmatprep.subr.mxu0 0.0
      %1274 = vmatpush1.msra.mxu0 0.0
      %1275 = vmatprep.subr.mxu0 0.0
      %1276 = vmatpush1.msra.mxu0 0.0
      %1277 = vmatprep.subr.mxu0 0.0
      %1278 = vmatpush1.msra.mxu0 0.0
      %1279 = vmatprep.subr.mxu0 0.0
      %1280 = vmatpush1.msra.mxu0 0.0
      %1281 = vmatprep.subr.mxu0 0.0
      %1282 = vmatpush1.msra.mxu0 0.0
      %1283 = vmatprep.subr.mxu0 0.0
      %1284 = vmatpush1.msra.mxu0 0.0
      %1285 = vmatprep.subr.mxu0 0.0
      %1286 = vmatpush1.msra.mxu0 0.0
      %1287 = vmatprep.subr.mxu0 0.0
      %1288 = vmatpush1.msra.mxu0 0.0
      %1289 = vmatprep.subr.mxu0 0.0
      %1290 = vmatpush1.msra.mxu0 0.0
      %1291 = vmatprep.subr.mxu0 0.0
      %1292 = vmatpush1.msra.mxu0 0.0
      %1293 = vmatprep.subr.mxu0 0.0
      %1294 = vmatpush1.msra.mxu0 0.0
      %1295 = vmatprep.subr.mxu0 0.0
      %1296 = vmatpush1.msra.mxu0 0.0
      %1297 = vmatprep.subr.mxu0 0.0
      %1298 = vmatpush1.msra.mxu0 0.0
      %1299 = vmatprep.subr.mxu0 0.0
      %1300 = vmatpush1.msra.mxu0 0.0
      %1301 = vmatprep.subr.mxu0 0.0
      %1302 = vmatpush1.msra.mxu0 0.0
      %1303 = vmatprep.subr.mxu0 0.0
      %1304 = vmatpush1.msra.mxu0 0.0
      %1305 = vmatprep.subr.mxu0 0.0
      %1306 = vmatpush1.msra.mxu0 0.0
      %1307 = vmatprep.subr.mxu0 0.0
      %1308 = vmatpush1.msra.mxu0 0.0
      %1309 = vmatprep.subr.mxu0 0.0
      %1310 = vmatpush1.msra.mxu0 0.0
      %1311 = vmatprep.subr.mxu0 0.0
      %1312 = vmatpush1.msra.mxu0 0.0
      %1313 = vmatprep.subr.mxu0 0.0
      %1314 = vmatpush1.msra.mxu0 0.0
      %1315 = vmatprep.mubr.f32.mxu0 0.0
      %1316 = vmatmul.mubr.f32.gmra.mrb[0].mxu0 %v1246
      %v1317 = vpop.f32.mrb[0].mxu0
      %v1318 = vadd.f32 0.0, %v1317
      %v1319 = vpop.f32.mrb[0].mxu0
      %1320 = vdwg.mxu0
      %v1321 = vpack.c.bf16 %v1318, %v1318
      %v1323 = vcombine.high %v524, %v524
      %v1325 = vpack.c.bf16 %v524, %v524
      %v1326 = vpack.c.bf16 %v1323, %v1323
      %v1328 = vsel %vm555, %v1321, 0
      %vm1330 = vcmask 1041408
      %v1332 = vsel %vm1330, %v1325, 0
      %v1335 = vsel %vm1330, %v1326, 0
      %1337 = vmatprep.subr.bf16.mxu0 %v1335
      %1338 = vmatpush1.bf16.msra.mxu0 %v1332
      %1339 = vmatprep.subr.bf16.mxu0 0
      %1340 = vmatpush1.bf16.msra.mxu0 0
      %1341 = vmatprep.subr.bf16.mxu0 0
      %1342 = vmatpush1.bf16.msra.mxu0 0
      %1343 = vmatprep.subr.bf16.mxu0 0
      %1344 = vmatpush1.bf16.msra.mxu0 0
      %1345 = vmatprep.subr.bf16.mxu0 0
      %1346 = vmatpush1.bf16.msra.mxu0 0
      %1347 = vmatprep.subr.bf16.mxu0 0
      %1348 = vmatpush1.bf16.msra.mxu0 0
      %1349 = vmatprep.subr.bf16.mxu0 0
      %1350 = vmatpush1.bf16.msra.mxu0 0
      %1351 = vmatprep.subr.bf16.mxu0 0
      %1352 = vmatpush1.bf16.msra.mxu0 0
      %1353 = vmatprep.subr.bf16.mxu0 0
      %1354 = vmatpush1.bf16.msra.mxu0 0
      %1355 = vmatprep.subr.bf16.mxu0 0
      %1356 = vmatpush1.bf16.msra.mxu0 0
      %1357 = vmatprep.subr.bf16.mxu0 0
      %1358 = vmatpush1.bf16.msra.mxu0 0
      %1359 = vmatprep.subr.bf16.mxu0 0
      %1360 = vmatpush1.bf16.msra.mxu0 0
      %1361 = vmatprep.subr.bf16.mxu0 0
      %1362 = vmatpush1.bf16.msra.mxu0 0
      %1363 = vmatprep.subr.bf16.mxu0 0
      %1364 = vmatpush1.bf16.msra.mxu0 0
      %1365 = vmatprep.subr.bf16.mxu0 0
      %1366 = vmatpush1.bf16.msra.mxu0 0
      %1367 = vmatprep.subr.bf16.mxu0 0
      %1368 = vmatpush1.bf16.msra.mxu0 0
      %1369 = vmatprep.mubr.bf16.mxu0 0
      %1370 = vmatmul.mubr.bf16.gmra.mrb[0].mxu0 %v1328
      %v1371 = vpop.f32.mrb[0].mxu0
      %v1372 = vadd.f32 0.0, %v1371
      %v1373 = vpop.f32.mrb[0].mxu0
      %v1374 = vadd.f32 0.0, %v1373
      %v1375 = vpop.f32.mrb[0].mxu0
      %v1376 = vpop.f32.mrb[0].mxu0
      %1377 = vdwg.mxu0
      %v1378 = vpack.c.bf16 %v1372, %v1372
      %v1379 = vpack.c.bf16 %v1374, %v1374
      %v1380 = vld [vmem:[%s5] sm:$0xff]
      %v1381 = vld [vmem:[%s5 + $0x8] sm:$0xff]
      %v1382 = vld [vmem:[%s5 + $0x10] sm:$0xf]
      %v1383 = vld [vmem:[%s5 + $0x14] sm:$0xff]
      %v1384 = vld [vmem:[%s5 + $0x1c] sm:$0xff]
      %v1385 = vld [vmem:[%s5 + $0x24] sm:$0xf]
      %v1386 = vld [vmem:[%s5 + $0x28] sm:$0xff]
      %v1387 = vld [vmem:[%s5 + $0x30] sm:$0xff]
      %v1388 = vld [vmem:[%s5 + $0x38] sm:$0xf]
      %v1389 = vld [vmem:[%s5 + $0x3c] sm:$0xff]
      %v1390 = vld [vmem:[%s5 + $0x44] sm:$0xff]
      %v1391 = vld [vmem:[%s5 + $0x4c] sm:$0xf]
      %v1392 = vld [vmem:[%s5 + $0x50] sm:$0xff]
      %v1393 = vld [vmem:[%s5 + $0x58] sm:$0xff]
      %v1394 = vld [vmem:[%s5 + $0x60] sm:$0xf]
      %v1395 = vld [vmem:[%s5 + $0x64] sm:$0xff]
      %v1396 = vld [vmem:[%s5 + $0x6c] sm:$0xff]
      %v1397 = vld [vmem:[%s5 + $0x74] sm:$0xf]
      %v1398 = vld [vmem:[%s5 + $0x78] sm:$0xff]
      %v1399 = vld [vmem:[%s5 + $0x80] sm:$0xff]
      %v1400 = vld [vmem:[%s5 + $0x88] sm:$0xf]
      %v1401 = vld [vmem:[%s5 + $0x8c] sm:$0xff]
      %v1402 = vld [vmem:[%s5 + $0x94] sm:$0xff]
      %v1403 = vld [vmem:[%s5 + $0x9c] sm:$0xf]
      %v1404 = vld [vmem:[%s5 + $0xa0] sm:$0xff]
      %v1405 = vld [vmem:[%s5 + $0xa8] sm:$0xff]
      %v1406 = vld [vmem:[%s5 + $0xb0] sm:$0xf]
      %v1407 = vld [vmem:[%s5 + $0xb4] sm:$0xff]
      %v1408 = vld [vmem:[%s5 + $0xbc] sm:$0xff]
      %v1409 = vld [vmem:[%s5 + $0xc4] sm:$0xf]
      %v1410 = vld [vmem:[%s5 + $0xc8] sm:$0xff]
      %v1411 = vld [vmem:[%s5 + $0xd0] sm:$0xff]
      %v1412 = vld [vmem:[%s5 + $0xd8] sm:$0xf]
      %v1413 = vld [vmem:[%s5 + $0xdc] sm:$0xff]
      %v1414 = vld [vmem:[%s5 + $0xe4] sm:$0xff]
      %v1415 = vld [vmem:[%s5 + $0xec] sm:$0xf]
      %v1416 = vld [vmem:[%s5 + $0xf0] sm:$0xff]
      %v1417 = vld [vmem:[%s5 + $0xf8] sm:$0xff]
      %v1418 = vld [vmem:[%s5 + $0x100] sm:$0xf]
      %v1419 = vld [vmem:[%s5 + $0x104] sm:$0xff]
      %v1420 = vld [vmem:[%s5 + $0x10c] sm:$0xff]
      %v1421 = vld [vmem:[%s5 + $0x114] sm:$0xf]
      %v1422 = vld [vmem:[%s5 + $0x118] sm:$0xff]
      %v1423 = vld [vmem:[%s5 + $0x120] sm:$0xff]
      %v1424 = vld [vmem:[%s5 + $0x128] sm:$0xf]
      %v1425 = vld [vmem:[%s5 + $0x12c] sm:$0xff]
      %v1426 = vld [vmem:[%s5 + $0x134] sm:$0xff]
      %v1427 = vld [vmem:[%s5 + $0x13c] sm:$0xf]
      %v1428 = vld [vmem:[%s5 + $0x140] sm:$0xff]
      %v1429 = vld [vmem:[%s5 + $0x148] sm:$0xff]
      %v1430 = vld [vmem:[%s5 + $0x150] sm:$0xf]
      %v1431 = vld [vmem:[%s5 + $0x154] sm:$0xff]
      %v1432 = vld [vmem:[%s5 + $0x15c] sm:$0xff]
      %v1433 = vld [vmem:[%s5 + $0x164] sm:$0xf]
      %v1434 = vrot.slane %v1242, 4
      %v1436 = vmul.f32 %v523, %v1434
      %1437 = vrot.lane.b32.xlu0 %v1238, 124
      %v1438 = vpop.permute.xlu0 %1437
      %v1439 = vsel %vm555, %v1438, 0
      %v1442 = vsel %vm548, %v1436, 0
      %1444 = vmatprep.subr.mxu0 0.0
      %1445 = vmatpush1.msra.mxu0 %v1442
      %1446 = vmatprep.subr.mxu0 0.0
      %1447 = vmatpush1.msra.mxu0 0.0
      %1448 = vmatprep.subr.mxu0 0.0
      %1449 = vmatpush1.msra.mxu0 0.0
      %1450 = vmatprep.subr.mxu0 0.0
      %1451 = vmatpush1.msra.mxu0 0.0
      %1452 = vmatprep.subr.mxu0 0.0
      %1453 = vmatpush1.msra.mxu0 0.0
      %1454 = vmatprep.subr.mxu0 0.0
      %1455 = vmatpush1.msra.mxu0 0.0
      %1456 = vmatprep.subr.mxu0 0.0
      %1457 = vmatpush1.msra.mxu0 0.0
      %1458 = vmatprep.subr.mxu0 0.0
      %1459 = vmatpush1.msra.mxu0 0.0
      %1460 = vmatprep.subr.mxu0 0.0
      %1461 = vmatpush1.msra.mxu0 0.0
      %1462 = vmatprep.subr.mxu0 0.0
      %1463 = vmatpush1.msra.mxu0 0.0
      %1464 = vmatprep.subr.mxu0 0.0
      %1465 = vmatpush1.msra.mxu0 0.0
      %1466 = vmatprep.subr.mxu0 0.0
      %1467 = vmatpush1.msra.mxu0 0.0
      %1468 = vmatprep.subr.mxu0 0.0
      %1469 = vmatpush1.msra.mxu0 0.0
      %1470 = vmatprep.subr.mxu0 0.0
      %1471 = vmatpush1.msra.mxu0 0.0
      %1472 = vmatprep.subr.mxu0 0.0
      %1473 = vmatpush1.msra.mxu0 0.0
      %1474 = vmatprep.subr.mxu0 0.0
      %1475 = vmatpush1.msra.mxu0 0.0
      %1476 = vmatprep.subr.mxu0 0.0
      %1477 = vmatpush1.msra.mxu0 0.0
      %1478 = vmatprep.subr.mxu0 0.0
      %1479 = vmatpush1.msra.mxu0 0.0
      %1480 = vmatprep.subr.mxu0 0.0
      %1481 = vmatpush1.msra.mxu0 0.0
      %1482 = vmatprep.subr.mxu0 0.0
      %1483 = vmatpush1.msra.mxu0 0.0
      %1484 = vmatprep.subr.mxu0 0.0
      %1485 = vmatpush1.msra.mxu0 0.0
      %1486 = vmatprep.subr.mxu0 0.0
      %1487 = vmatpush1.msra.mxu0 0.0
      %1488 = vmatprep.subr.mxu0 0.0
      %1489 = vmatpush1.msra.mxu0 0.0
      %1490 = vmatprep.subr.mxu0 0.0
      %1491 = vmatpush1.msra.mxu0 0.0
      %1492 = vmatprep.subr.mxu0 0.0
      %1493 = vmatpush1.msra.mxu0 0.0
      %1494 = vmatprep.subr.mxu0 0.0
      %1495 = vmatpush1.msra.mxu0 0.0
      %1496 = vmatprep.subr.mxu0 0.0
      %1497 = vmatpush1.msra.mxu0 0.0
      %1498 = vmatprep.subr.mxu0 0.0
      %1499 = vmatpush1.msra.mxu0 0.0
      %1500 = vmatprep.subr.mxu0 0.0
      %1501 = vmatpush1.msra.mxu0 0.0
      %1502 = vmatprep.subr.mxu0 0.0
      %1503 = vmatpush1.msra.mxu0 0.0
      %1504 = vmatprep.subr.mxu0 0.0
      %1505 = vmatpush1.msra.mxu0 0.0
      %1506 = vmatprep.subr.mxu0 0.0
      %1507 = vmatpush1.msra.mxu0 0.0
      %1508 = vmatprep.mubr.f32.mxu0 0.0
      %1509 = vmatmul.mubr.f32.gmra.mrb[0].mxu0 %v1439
      %v1510 = vpop.f32.mrb[0].mxu0
      %v1511 = vadd.f32 0.0, %v1510
      %v1512 = vpop.f32.mrb[0].mxu0
      %1513 = vdwg.mxu0
      %v1514 = vpack.c.bf16 %v1511, %v1511
      %v1515 = vpack.c.bf16 %v525, %v525
      %v1517 = vsel %vm555, %v1514, 0
      %v1520 = vsel %vm1330, %v1515, 0
      %1522 = vmatprep.subr.bf16.mxu0 0
      %1523 = vmatpush1.bf16.msra.mxu0 %v1520
      %1524 = vmatprep.subr.bf16.mxu0 0
      %1525 = vmatpush1.bf16.msra.mxu0 0
      %1526 = vmatprep.subr.bf16.mxu0 0
      %1527 = vmatpush1.bf16.msra.mxu0 0
      %1528 = vmatprep.subr.bf16.mxu0 0
      %1529 = vmatpush1.bf16.msra.mxu0 0
      %1530 = vmatprep.subr.bf16.mxu0 0
      %1531 = vmatpush1.bf16.msra.mxu0 0
      %1532 = vmatprep.subr.bf16.mxu0 0
      %1533 = vmatpush1.bf16.msra.mxu0 0
      %1534 = vmatprep.subr.bf16.mxu0 0
      %1535 = vmatpush1.bf16.msra.mxu0 0
      %1536 = vmatprep.subr.bf16.mxu0 0
      %1537 = vmatpush1.bf16.msra.mxu0 0
      %1538 = vmatprep.subr.bf16.mxu0 0
      %1539 = vmatpush1.bf16.msra.mxu0 0
      %1540 = vmatprep.subr.bf16.mxu0 0
      %1541 = vmatpush1.bf16.msra.mxu0 0
      %1542 = vmatprep.subr.bf16.mxu0 0
      %1543 = vmatpush1.bf16.msra.mxu0 0
      %1544 = vmatprep.subr.bf16.mxu0 0
      %1545 = vmatpush1.bf16.msra.mxu0 0
      %1546 = vmatprep.subr.bf16.mxu0 0
      %1547 = vmatpush1.bf16.msra.mxu0 0
      %1548 = vmatprep.subr.bf16.mxu0 0
      %1549 = vmatpush1.bf16.msra.mxu0 0
      %1550 = vmatprep.subr.bf16.mxu0 0
      %1551 = vmatpush1.bf16.msra.mxu0 0
      %1552 = vmatprep.subr.bf16.mxu0 0
      %1553 = vmatpush1.bf16.msra.mxu0 0
      %1554 = vmatprep.mubr.bf16.mxu0 0
      %1555 = vmatmul.mubr.bf16.gmra.mrb[0].mxu0 %v1517
      %v1556 = vpop.f32.mrb[0].mxu0
      %v1557 = vadd.f32 0.0, %v1556
      %v1558 = vpop.f32.mrb[0].mxu0
      %v1559 = vpop.f32.mrb[0].mxu0
      %v1560 = vpop.f32.mrb[0].mxu0
      %1561 = vdwg.mxu0
      %v1562 = vpack.c.bf16 %v1557, %v1557
      %v1563 = vld [vmem:[%s6] sm:$0xff]
      %v1564 = vld [vmem:[%s6 + $0x8] sm:$0xff]
      %v1565 = vld [vmem:[%s6 + $0x10] sm:$0xf]
      %v1566 = vld [vmem:[%s6 + $0x14] sm:$0xff]
      %v1567 = vld [vmem:[%s6 + $0x1c] sm:$0xff]
      %v1568 = vld [vmem:[%s6 + $0x24] sm:$0xf]
      %v1569 = vld [vmem:[%s6 + $0x28] sm:$0xff]
      %v1570 = vld [vmem:[%s6 + $0x30] sm:$0xff]
      %v1571 = vld [vmem:[%s6 + $0x38] sm:$0xf]
      %v1572 = vld [vmem:[%s6 + $0x3c] sm:$0xff]
      %v1573 = vld [vmem:[%s6 + $0x44] sm:$0xff]
      %v1574 = vld [vmem:[%s6 + $0x4c] sm:$0xf]
      %v1575 = vld [vmem:[%s6 + $0x50] sm:$0xff]
      %v1576 = vld [vmem:[%s6 + $0x58] sm:$0xff]
      %v1577 = vld [vmem:[%s6 + $0x60] sm:$0xf]
      %v1578 = vld [vmem:[%s6 + $0x64] sm:$0xff]
      %v1579 = vld [vmem:[%s6 + $0x6c] sm:$0xff]
      %v1580 = vld [vmem:[%s6 + $0x74] sm:$0xf]
      %v1581 = vld [vmem:[%s6 + $0x78] sm:$0xff]
      %v1582 = vld [vmem:[%s6 + $0x80] sm:$0xff]
      %v1583 = vld [vmem:[%s6 + $0x88] sm:$0xf]
      %v1584 = vld [vmem:[%s6 + $0x8c] sm:$0xff]
      %v1585 = vld [vmem:[%s6 + $0x94] sm:$0xff]
      %v1586 = vld [vmem:[%s6 + $0x9c] sm:$0xf]
      %v1611 = vunpack.c.l.b16 %v1563
      %v1612 = vunpack.c.h.b16 %v1563
      %v1613 = vunpack.c.l.b16 %v1564
      %v1614 = vunpack.c.h.b16 %v1564
      %v1615 = vunpack.c.l.b16 %v1565
      %v1616 = vunpack.c.l.b16 %v1566
      %v1617 = vunpack.c.h.b16 %v1566
      %v1618 = vunpack.c.l.b16 %v1567
      %v1619 = vunpack.c.h.b16 %v1567
      %v1620 = vunpack.c.l.b16 %v1568
      %v1621 = vunpack.c.l.b16 %v1569
      %v1622 = vunpack.c.h.b16 %v1569
      %v1623 = vunpack.c.l.b16 %v1570
      %v1624 = vunpack.c.h.b16 %v1570
      %v1625 = vunpack.c.l.b16 %v1571
      %v1626 = vunpack.c.l.b16 %v1572
      %v1627 = vunpack.c.h.b16 %v1572
      %v1628 = vunpack.c.l.b16 %v1573
      %v1629 = vunpack.c.h.b16 %v1573
      %v1630 = vunpack.c.l.b16 %v1574
      %v1631 = vunpack.c.l.b16 %v1575
      %v1632 = vunpack.c.h.b16 %v1575
      %v1633 = vunpack.c.l.b16 %v1576
      %v1634 = vunpack.c.h.b16 %v1576
      %v1635 = vunpack.c.l.b16 %v1577
      %v1636 = vunpack.c.l.b16 %v1578
      %v1637 = vunpack.c.h.b16 %v1578
      %v1638 = vunpack.c.l.b16 %v1579
      %v1639 = vunpack.c.h.b16 %v1579
      %v1640 = vunpack.c.l.b16 %v1580
      %v1641 = vunpack.c.l.b16 %v1581
      %v1642 = vunpack.c.h.b16 %v1581
      %v1643 = vunpack.c.l.b16 %v1582
      %v1644 = vunpack.c.h.b16 %v1582
      %v1645 = vunpack.c.l.b16 %v1583
      %v1646 = vunpack.c.l.b16 %v1584
      %v1647 = vunpack.c.h.b16 %v1584
      %v1648 = vunpack.c.l.b16 %v1585
      %v1649 = vunpack.c.h.b16 %v1585
      %v1650 = vunpack.c.l.b16 %v1586
      %v1651 = vpack.c.b16 %v1616, %v1611
      %v1652 = vpack.c.b16 %v1617, %v1612
      %v1653 = vpack.c.b16 %v1618, %v1613
      %v1654 = vpack.c.b16 %v1619, %v1614
      %v1655 = vpack.c.b16 %v1620, %v1615
      %v1656 = vpack.c.b16 %v1626, %v1621
      %v1657 = vpack.c.b16 %v1627, %v1622
      %v1658 = vpack.c.b16 %v1628, %v1623
      %v1659 = vpack.c.b16 %v1629, %v1624
      %v1660 = vpack.c.b16 %v1630, %v1625
      %v1661 = vpack.c.b16 %v1636, %v1631
      %v1662 = vpack.c.b16 %v1637, %v1632
      %v1663 = vpack.c.b16 %v1638, %v1633
      %v1664 = vpack.c.b16 %v1639, %v1634
      %v1665 = vpack.c.b16 %v1640, %v1635
      %v1666 = vpack.c.b16 %v1646, %v1641
      %v1667 = vpack.c.b16 %v1647, %v1642
      %v1668 = vpack.c.b16 %v1648, %v1643
      %v1669 = vpack.c.b16 %v1649, %v1644
      %v1670 = vpack.c.b16 %v1650, %v1645
      %v1692 = vsel %vm804, %v1562, 0
      %1694 = vmatprep.subr.bf16.mxu0 %v1652
      %1695 = vmatpush1.bf16.msra.mxu0 %v1651
      %1696 = vmatprep.subr.bf16.mxu0 %v1657
      %1697 = vmatpush1.bf16.msra.mxu0 %v1656
      %1698 = vmatprep.subr.bf16.mxu0 %v1662
      %1699 = vmatpush1.bf16.msra.mxu0 %v1661
      %1700 = vmatprep.subr.bf16.mxu0 %v1667
      %1701 = vmatpush1.bf16.msra.mxu0 %v1666
      %1702 = vmatprep.subr.bf16.mxu0 0
      %1703 = vmatpush1.bf16.msra.mxu0 0
      %1704 = vmatprep.subr.bf16.mxu0 0
      %1705 = vmatpush1.bf16.msra.mxu0 0
      %1706 = vmatprep.subr.bf16.mxu0 0
      %1707 = vmatpush1.bf16.msra.mxu0 0
      %1708 = vmatprep.subr.bf16.mxu0 0
      %1709 = vmatpush1.bf16.msra.mxu0 0
      %1710 = vmatprep.subr.bf16.mxu0 0
      %1711 = vmatpush1.bf16.msra.mxu0 0
      %1712 = vmatprep.subr.bf16.mxu0 0
      %1713 = vmatpush1.bf16.msra.mxu0 0
      %1714 = vmatprep.subr.bf16.mxu0 0
      %1715 = vmatpush1.bf16.msra.mxu0 0
      %1716 = vmatprep.subr.bf16.mxu0 0
      %1717 = vmatpush1.bf16.msra.mxu0 0
      %1718 = vmatprep.subr.bf16.mxu0 0
      %1719 = vmatpush1.bf16.msra.mxu0 0
      %1720 = vmatprep.subr.bf16.mxu0 0
      %1721 = vmatpush1.bf16.msra.mxu0 0
      %1722 = vmatprep.subr.bf16.mxu0 0
      %1723 = vmatpush1.bf16.msra.mxu0 0
      %1724 = vmatprep.subr.bf16.mxu0 0
      %1725 = vmatpush1.bf16.msra.mxu0 0
      %1726 = vmatprep.mubr.bf16.mxu0 0
      %1727 = vmatmul.mubr.bf16.gmra.mrb[0].mxu0 %v1692
      %v1728 = vpop.f32.mrb[0].mxu0
      %v1729 = vadd.f32 0.0, %v1728
      %v1730 = vpop.f32.mrb[0].mxu0
      %v1731 = vadd.f32 0.0, %v1730
      %v1732 = vpop.f32.mrb[0].mxu0
      %v1733 = vpop.f32.mrb[0].mxu0
      %1734 = vdwg.mxu0
      %1735 = vmatprep.subr.bf16.mxu0 %v1654
      %1736 = vmatpush1.bf16.msra.mxu0 %v1653
      %1737 = vmatprep.subr.bf16.mxu0 %v1659
      %1738 = vmatpush1.bf16.msra.mxu0 %v1658
      %1739 = vmatprep.subr.bf16.mxu0 %v1664
      %1740 = vmatpush1.bf16.msra.mxu0 %v1663
      %1741 = vmatprep.subr.bf16.mxu0 %v1669
      %1742 = vmatpush1.bf16.msra.mxu0 %v1668
      %1743 = vmatprep.subr.bf16.mxu0 0
      %1744 = vmatpush1.bf16.msra.mxu0 0
      %1745 = vmatprep.subr.bf16.mxu0 0
      %1746 = vmatpush1.bf16.msra.mxu0 0
      %1747 = vmatprep.subr.bf16.mxu0 0
      %1748 = vmatpush1.bf16.msra.mxu0 0
      %1749 = vmatprep.subr.bf16.mxu0 0
      %1750 = vmatpush1.bf16.msra.mxu0 0
      %1751 = vmatprep.subr.bf16.mxu0 0
      %1752 = vmatpush1.bf16.msra.mxu0 0
      %1753 = vmatprep.subr.bf16.mxu0 0
      %1754 = vmatpush1.bf16.msra.mxu0 0
      %1755 = vmatprep.subr.bf16.mxu0 0
      %1756 = vmatpush1.bf16.msra.mxu0 0
      %1757 = vmatprep.subr.bf16.mxu0 0
      %1758 = vmatpush1.bf16.msra.mxu0 0
      %1759 = vmatprep.subr.bf16.mxu0 0
      %1760 = vmatpush1.bf16.msra.mxu0 0
      %1761 = vmatprep.subr.bf16.mxu0 0
      %1762 = vmatpush1.bf16.msra.mxu0 0
      %1763 = vmatprep.subr.bf16.mxu0 0
      %1764 = vmatpush1.bf16.msra.mxu0 0
      %1765 = vmatprep.subr.bf16.mxu0 0
      %1766 = vmatpush1.bf16.msra.mxu0 0
      %1767 = vmatprep.mubr.bf16.mxu0 0
      %1768 = vmatmul.mubr.bf16.gmra.mrb[0].mxu0 %v1692
      %v1769 = vpop.f32.mrb[0].mxu0
      %v1770 = vadd.f32 0.0, %v1769
      %v1771 = vpop.f32.mrb[0].mxu0
      %v1772 = vadd.f32 0.0, %v1771
      %v1773 = vpop.f32.mrb[0].mxu0
      %v1774 = vpop.f32.mrb[0].mxu0
      %1775 = vdwg.mxu0
      %1776 = vmatprep.subr.bf16.mxu0 0
      %1777 = vmatpush1.bf16.msra.mxu0 %v1655
      %1778 = vmatprep.subr.bf16.mxu0 0
      %1779 = vmatpush1.bf16.msra.mxu0 %v1660
      %1780 = vmatprep.subr.bf16.mxu0 0
      %1781 = vmatpush1.bf16.msra.mxu0 %v1665
      %1782 = vmatprep.subr.bf16.mxu0 0
      %1783 = vmatpush1.bf16.msra.mxu0 %v1670
      %1784 = vmatprep.subr.bf16.mxu0 0
      %1785 = vmatpush1.bf16.msra.mxu0 0
      %1786 = vmatprep.subr.bf16.mxu0 0
      %1787 = vmatpush1.bf16.msra.mxu0 0
      %1788 = vmatprep.subr.bf16.mxu0 0
      %1789 = vmatpush1.bf16.msra.mxu0 0
      %1790 = vmatprep.subr.bf16.mxu0 0
      %1791 = vmatpush1.bf16.msra.mxu0 0
      %1792 = vmatprep.subr.bf16.mxu0 0
      %1793 = vmatpush1.bf16.msra.mxu0 0
      %1794 = vmatprep.subr.bf16.mxu0 0
      %1795 = vmatpush1.bf16.msra.mxu0 0
      %1796 = vmatprep.subr.bf16.mxu0 0
      %1797 = vmatpush1.bf16.msra.mxu0 0
      %1798 = vmatprep.subr.bf16.mxu0 0
      %1799 = vmatpush1.bf16.msra.mxu0 0
      %1800 = vmatprep.subr.bf16.mxu0 0
      %1801 = vmatpush1.bf16.msra.mxu0 0
      %1802 = vmatprep.subr.bf16.mxu0 0
      %1803 = vmatpush1.bf16.msra.mxu0 0
      %1804 = vmatprep.subr.bf16.mxu0 0
      %1805 = vmatpush1.bf16.msra.mxu0 0
      %1806 = vmatprep.subr.bf16.mxu0 0
      %1807 = vmatpush1.bf16.msra.mxu0 0
      %1808 = vmatprep.mubr.bf16.mxu0 0
      %1809 = vmatmul.mubr.bf16.gmra.mrb[0].mxu0 %v1692
      %v1810 = vpop.f32.mrb[0].mxu0
      %v1811 = vadd.f32 0.0, %v1810
      %v1812 = vpop.f32.mrb[0].mxu0
      %v1813 = vpop.f32.mrb[0].mxu0
      %v1814 = vpop.f32.mrb[0].mxu0
      %1815 = vdwg.mxu0
      %v1870 = vunpack.c.l.b16 %v1380
      %v1871 = vunpack.c.h.b16 %v1380
      %v1872 = vunpack.c.l.b16 %v1381
      %v1873 = vunpack.c.h.b16 %v1381
      %v1874 = vunpack.c.l.b16 %v1382
      %v1875 = vunpack.c.l.b16 %v1383
      %v1876 = vunpack.c.h.b16 %v1383
      %v1877 = vunpack.c.l.b16 %v1384
      %v1878 = vunpack.c.h.b16 %v1384
      %v1879 = vunpack.c.l.b16 %v1385
      %v1880 = vunpack.c.l.b16 %v1386
      %v1881 = vunpack.c.h.b16 %v1386
      %v1882 = vunpack.c.l.b16 %v1387
      %v1883 = vunpack.c.h.b16 %v1387
      %v1884 = vunpack.c.l.b16 %v1388
      %v1885 = vunpack.c.l.b16 %v1389
      %v1886 = vunpack.c.h.b16 %v1389
      %v1887 = vunpack.c.l.b16 %v1390
      %v1888 = vunpack.c.h.b16 %v1390
      %v1889 = vunpack.c.l.b16 %v1391
      %v1890 = vunpack.c.l.b16 %v1392
      %v1891 = vunpack.c.h.b16 %v1392
      %v1892 = vunpack.c.l.b16 %v1393
      %v1893 = vunpack.c.h.b16 %v1393
      %v1894 = vunpack.c.l.b16 %v1394
      %v1895 = vunpack.c.l.b16 %v1395
      %v1896 = vunpack.c.h.b16 %v1395
      %v1897 = vunpack.c.l.b16 %v1396
      %v1898 = vunpack.c.h.b16 %v1396
      %v1899 = vunpack.c.l.b16 %v1397
      %v1900 = vunpack.c.l.b16 %v1398
      %v1901 = vunpack.c.h.b16 %v1398
      %v1902 = vunpack.c.l.b16 %v1399
      %v1903 = vunpack.c.h.b16 %v1399
      %v1904 = vunpack.c.l.b16 %v1400
      %v1905 = vunpack.c.l.b16 %v1401
      %v1906 = vunpack.c.h.b16 %v1401
      %v1907 = vunpack.c.l.b16 %v1402
      %v1908 = vunpack.c.h.b16 %v1402
      %v1909 = vunpack.c.l.b16 %v1403
      %v1910 = vunpack.c.l.b16 %v1404
      %v1911 = vunpack.c.h.b16 %v1404
      %v1912 = vunpack.c.l.b16 %v1405
      %v1913 = vunpack.c.h.b16 %v1405
      %v1914 = vunpack.c.l.b16 %v1406
      %v1915 = vunpack.c.l.b16 %v1407
      %v1916 = vunpack.c.h.b16 %v1407
      %v1917 = vunpack.c.l.b16 %v1408
      %v1918 = vunpack.c.h.b16 %v1408
      %v1919 = vunpack.c.l.b16 %v1409
      %v1920 = vunpack.c.l.b16 %v1410
      %v1921 = vunpack.c.h.b16 %v1410
      %v1922 = vunpack.c.l.b16 %v1411
      %v1923 = vunpack.c.h.b16 %v1411
      %v1924 = vunpack.c.l.b16 %v1412
      %v1925 = vunpack.c.l.b16 %v1413
      %v1926 = vunpack.c.h.b16 %v1413
      %v1927 = vunpack.c.l.b16 %v1414
      %v1928 = vunpack.c.h.b16 %v1414
      %v1929 = vunpack.c.l.b16 %v1415
      %v1930 = vunpack.c.l.b16 %v1416
      %v1931 = vunpack.c.h.b16 %v1416
      %v1932 = vunpack.c.l.b16 %v1417
      %v1933 = vunpack.c.h.b16 %v1417
      %v1934 = vunpack.c.l.b16 %v1418
      %v1935 = vunpack.c.l.b16 %v1419
      %v1936 = vunpack.c.h.b16 %v1419
      %v1937 = vunpack.c.l.b16 %v1420
      %v1938 = vunpack.c.h.b16 %v1420
      %v1939 = vunpack.c.l.b16 %v1421
      %v1940 = vunpack.c.l.b16 %v1422
      %v1941 = vunpack.c.h.b16 %v1422
      %v1942 = vunpack.c.l.b16 %v1423
      %v1943 = vunpack.c.h.b16 %v1423
      %v1944 = vunpack.c.l.b16 %v1424
      %v1945 = vunpack.c.l.b16 %v1425
      %v1946 = vunpack.c.h.b16 %v1425
      %v1947 = vunpack.c.l.b16 %v1426
      %v1948 = vunpack.c.h.b16 %v1426
      %v1949 = vunpack.c.l.b16 %v1427
      %v1950 = vunpack.c.l.b16 %v1428
      %v1951 = vunpack.c.h.b16 %v1428
      %v1952 = vunpack.c.l.b16 %v1429
      %v1953 = vunpack.c.h.b16 %v1429
      %v1954 = vunpack.c.l.b16 %v1430
      %v1955 = vunpack.c.l.b16 %v1431
      %v1956 = vunpack.c.h.b16 %v1431
      %v1957 = vunpack.c.l.b16 %v1432
      %v1958 = vunpack.c.h.b16 %v1432
      %v1959 = vunpack.c.l.b16 %v1433
      %v1960 = vpack.c.b16 %v1875, %v1870
      %v1961 = vpack.c.b16 %v1876, %v1871
      %v1962 = vpack.c.b16 %v1877, %v1872
      %v1963 = vpack.c.b16 %v1878, %v1873
      %v1964 = vpack.c.b16 %v1879, %v1874
      %v1965 = vpack.c.b16 %v1885, %v1880
      %v1966 = vpack.c.b16 %v1886, %v1881
      %v1967 = vpack.c.b16 %v1887, %v1882
      %v1968 = vpack.c.b16 %v1888, %v1883
      %v1969 = vpack.c.b16 %v1889, %v1884
      %v1970 = vpack.c.b16 %v1895, %v1890
      %v1971 = vpack.c.b16 %v1896, %v1891
      %v1972 = vpack.c.b16 %v1897, %v1892
      %v1973 = vpack.c.b16 %v1898, %v1893
      %v1974 = vpack.c.b16 %v1899, %v1894
      %v1975 = vpack.c.b16 %v1905, %v1900
      %v1976 = vpack.c.b16 %v1906, %v1901
      %v1977 = vpack.c.b16 %v1907, %v1902
      %v1978 = vpack.c.b16 %v1908, %v1903
      %v1979 = vpack.c.b16 %v1909, %v1904
      %v1980 = vpack.c.b16 %v1915, %v1910
      %v1981 = vpack.c.b16 %v1916, %v1911
      %v1982 = vpack.c.b16 %v1917, %v1912
      %v1983 = vpack.c.b16 %v1918, %v1913
      %v1984 = vpack.c.b16 %v1919, %v1914
      %v1985 = vpack.c.b16 %v1925, %v1920
      %v1986 = vpack.c.b16 %v1926, %v1921
      %v1987 = vpack.c.b16 %v1927, %v1922
      %v1988 = vpack.c.b16 %v1928, %v1923
      %v1989 = vpack.c.b16 %v1929, %v1924
      %v1990 = vpack.c.b16 %v1935, %v1930
      %v1991 = vpack.c.b16 %v1936, %v1931
      %v1992 = vpack.c.b16 %v1937, %v1932
      %v1993 = vpack.c.b16 %v1938, %v1933
      %v1994 = vpack.c.b16 %v1939, %v1934
      %v1995 = vpack.c.b16 %v1945, %v1940
      %v1996 = vpack.c.b16 %v1946, %v1941
      %v1997 = vpack.c.b16 %v1947, %v1942
      %v1998 = vpack.c.b16 %v1948, %v1943
      %v1999 = vpack.c.b16 %v1949, %v1944
      %v2000 = vpack.c.b16 %v1955, %v1950
      %v2001 = vpack.c.b16 %v1956, %v1951
      %v2002 = vpack.c.b16 %v1957, %v1952
      %v2003 = vpack.c.b16 %v1958, %v1953
      %v2004 = vpack.c.b16 %v1959, %v1954
      %vm2050 = vcmask 130048
      %v2052 = vsel %vm2050, %v1379, 0
      %2054 = vmatprep.subr.bf16.mxu0 %v1961
      %2055 = vmatpush1.bf16.msra.mxu0 %v1960
      %2056 = vmatprep.subr.bf16.mxu0 %v1966
      %2057 = vmatpush1.bf16.msra.mxu0 %v1965
      %2058 = vmatprep.subr.bf16.mxu0 %v1971
      %2059 = vmatpush1.bf16.msra.mxu0 %v1970
      %2060 = vmatprep.subr.bf16.mxu0 %v1976
      %2061 = vmatpush1.bf16.msra.mxu0 %v1975
      %2062 = vmatprep.subr.bf16.mxu0 %v1981
      %2063 = vmatpush1.bf16.msra.mxu0 %v1980
      %2064 = vmatprep.subr.bf16.mxu0 %v1986
      %2065 = vmatpush1.bf16.msra.mxu0 %v1985
      %2066 = vmatprep.subr.bf16.mxu0 %v1991
      %2067 = vmatpush1.bf16.msra.mxu0 %v1990
      %2068 = vmatprep.subr.bf16.mxu0 %v1996
      %2069 = vmatpush1.bf16.msra.mxu0 %v1995
      %2070 = vmatprep.subr.bf16.mxu0 %v2001
      %2071 = vmatpush1.bf16.msra.mxu0 %v2000
      %2072 = vmatprep.subr.bf16.mxu0 0
      %2073 = vmatpush1.bf16.msra.mxu0 0
      %2074 = vmatprep.subr.bf16.mxu0 0
      %2075 = vmatpush1.bf16.msra.mxu0 0
      %2076 = vmatprep.subr.bf16.mxu0 0
      %2077 = vmatpush1.bf16.msra.mxu0 0
      %2078 = vmatprep.subr.bf16.mxu0 0
      %2079 = vmatpush1.bf16.msra.mxu0 0
      %2080 = vmatprep.subr.bf16.mxu0 0
      %2081 = vmatpush1.bf16.msra.mxu0 0
      %2082 = vmatprep.subr.bf16.mxu0 0
      %2083 = vmatpush1.bf16.msra.mxu0 0
      %2084 = vmatprep.subr.bf16.mxu0 0
      %2085 = vmatpush1.bf16.msra.mxu0 0
      %2086 = vmatprep.mubr.bf16.mxu0 %v2052
      %2087 = vmatmul.mubr.bf16.gmra.mrb[0].mxu0 %v1378
      %v2088 = vpop.f32.mrb[0].mxu0
      %v2089 = vadd.f32 %v1729, %v2088
      %v2090 = vpop.f32.mrb[0].mxu0
      %v2091 = vadd.f32 %v1731, %v2090
      %v2092 = vpop.f32.mrb[0].mxu0
      %v2093 = vpop.f32.mrb[0].mxu0
      %2094 = vdwg.mxu0
      %2095 = vmatprep.subr.bf16.mxu0 %v1963
      %2096 = vmatpush1.bf16.msra.mxu0 %v1962
      %2097 = vmatprep.subr.bf16.mxu0 %v1968
      %2098 = vmatpush1.bf16.msra.mxu0 %v1967
      %2099 = vmatprep.subr.bf16.mxu0 %v1973
      %2100 = vmatpush1.bf16.msra.mxu0 %v1972
      %2101 = vmatprep.subr.bf16.mxu0 %v1978
      %2102 = vmatpush1.bf16.msra.mxu0 %v1977
      %2103 = vmatprep.subr.bf16.mxu0 %v1983
      %2104 = vmatpush1.bf16.msra.mxu0 %v1982
      %2105 = vmatprep.subr.bf16.mxu0 %v1988
      %2106 = vmatpush1.bf16.msra.mxu0 %v1987
      %2107 = vmatprep.subr.bf16.mxu0 %v1993
      %2108 = vmatpush1.bf16.msra.mxu0 %v1992
      %2109 = vmatprep.subr.bf16.mxu0 %v1998
      %2110 = vmatpush1.bf16.msra.mxu0 %v1997
      %2111 = vmatprep.subr.bf16.mxu0 %v2003
      %2112 = vmatpush1.bf16.msra.mxu0 %v2002
      %2113 = vmatprep.subr.bf16.mxu0 0
      %2114 = vmatpush1.bf16.msra.mxu0 0
      %2115 = vmatprep.subr.bf16.mxu0 0
      %2116 = vmatpush1.bf16.msra.mxu0 0
      %2117 = vmatprep.subr.bf16.mxu0 0
      %2118 = vmatpush1.bf16.msra.mxu0 0
      %2119 = vmatprep.subr.bf16.mxu0 0
      %2120 = vmatpush1.bf16.msra.mxu0 0
      %2121 = vmatprep.subr.bf16.mxu0 0
      %2122 = vmatpush1.bf16.msra.mxu0 0
      %2123 = vmatprep.subr.bf16.mxu0 0
      %2124 = vmatpush1.bf16.msra.mxu0 0
      %2125 = vmatprep.subr.bf16.mxu0 0
      %2126 = vmatpush1.bf16.msra.mxu0 0
      %2127 = vmatprep.mubr.bf16.mxu0 %v2052
      %2128 = vmatmul.mubr.bf16.gmra.mrb[0].mxu0 %v1378
      %v2129 = vpop.f32.mrb[0].mxu0
      %v2130 = vadd.f32 %v1770, %v2129
      %v2131 = vpop.f32.mrb[0].mxu0
      %v2132 = vadd.f32 %v1772, %v2131
      %v2133 = vpop.f32.mrb[0].mxu0
      %v2134 = vpop.f32.mrb[0].mxu0
      %2135 = vdwg.mxu0
      %2136 = vmatprep.subr.bf16.mxu0 0
      %2137 = vmatpush1.bf16.msra.mxu0 %v1964
      %2138 = vmatprep.subr.bf16.mxu0 0
      %2139 = vmatpush1.bf16.msra.mxu0 %v1969
      %2140 = vmatprep.subr.bf16.mxu0 0
      %2141 = vmatpush1.bf16.msra.mxu0 %v1974
      %2142 = vmatprep.subr.bf16.mxu0 0
      %2143 = vmatpush1.bf16.msra.mxu0 %v1979
      %2144 = vmatprep.subr.bf16.mxu0 0
      %2145 = vmatpush1.bf16.msra.mxu0 %v1984
      %2146 = vmatprep.subr.bf16.mxu0 0
      %2147 = vmatpush1.bf16.msra.mxu0 %v1989
      %2148 = vmatprep.subr.bf16.mxu0 0
      %2149 = vmatpush1.bf16.msra.mxu0 %v1994
      %2150 = vmatprep.subr.bf16.mxu0 0
      %2151 = vmatpush1.bf16.msra.mxu0 %v1999
      %2152 = vmatprep.subr.bf16.mxu0 0
      %2153 = vmatpush1.bf16.msra.mxu0 %v2004
      %2154 = vmatprep.subr.bf16.mxu0 0
      %2155 = vmatpush1.bf16.msra.mxu0 0
      %2156 = vmatprep.subr.bf16.mxu0 0
      %2157 = vmatpush1.bf16.msra.mxu0 0
      %2158 = vmatprep.subr.bf16.mxu0 0
      %2159 = vmatpush1.bf16.msra.mxu0 0
      %2160 = vmatprep.subr.bf16.mxu0 0
      %2161 = vmatpush1.bf16.msra.mxu0 0
      %2162 = vmatprep.subr.bf16.mxu0 0
      %2163 = vmatpush1.bf16.msra.mxu0 0
      %2164 = vmatprep.subr.bf16.mxu0 0
      %2165 = vmatpush1.bf16.msra.mxu0 0
      %2166 = vmatprep.subr.bf16.mxu0 0
      %2167 = vmatpush1.bf16.msra.mxu0 0
      %2168 = vmatprep.mubr.bf16.mxu0 %v2052
      %2169 = vmatmul.mubr.bf16.gmra.mrb[0].mxu0 %v1378
      %v2170 = vpop.f32.mrb[0].mxu0
      %v2171 = vadd.f32 %v1811, %v2170
      %v2172 = vpop.f32.mrb[0].mxu0
      %v2173 = vpop.f32.mrb[0].mxu0
      %v2174 = vpop.f32.mrb[0].mxu0
      %2175 = vdwg.mxu0
      %2177 = vset.pattern.permute.xlu0 0
      %2178 = vperm.xlu0 %2177, %v1235
      %v2179 = vpop.permute.xlu0 %2178
      %v2181 = vmul.f32 %v523, %v2179
      %2182 = vrot.lane.b32.xlu0 %v1238, 120
      %v2183 = vpop.permute.xlu0 %2182
      %v2184 = vsel %vm555, %v2183, 0
      %v2187 = vsel %vm548, %v2181, 0
      %2189 = vmatprep.subr.mxu0 0.0
      %2190 = vmatpush1.msra.mxu0 %v2187
      %2191 = vmatprep.subr.mxu0 0.0
      %2192 = vmatpush1.msra.mxu0 0.0
      %2193 = vmatprep.subr.mxu0 0.0
      %2194 = vmatpush1.msra.mxu0 0.0
      %2195 = vmatprep.subr.mxu0 0.0
      %2196 = vmatpush1.msra.mxu0 0.0
      %2197 = vmatprep.subr.mxu0 0.0
      %2198 = vmatpush1.msra.mxu0 0.0
      %2199 = vmatprep.subr.mxu0 0.0
      %2200 = vmatpush1.msra.mxu0 0.0
      %2201 = vmatprep.subr.mxu0 0.0
      %2202 = vmatpush1.msra.mxu0 0.0
      %2203 = vmatprep.subr.mxu0 0.0
      %2204 = vmatpush1.msra.mxu0 0.0
      %2205 = vmatprep.subr.mxu0 0.0
      %2206 = vmatpush1.msra.mxu0 0.0
      %2207 = vmatprep.subr.mxu0 0.0
      %2208 = vmatpush1.msra.mxu0 0.0
      %2209 = vmatprep.subr.mxu0 0.0
      %2210 = vmatpush1.msra.mxu0 0.0
      %2211 = vmatprep.subr.mxu0 0.0
      %2212 = vmatpush1.msra.mxu0 0.0
      %2213 = vmatprep.subr.mxu0 0.0
      %2214 = vmatpush1.msra.mxu0 0.0
      %2215 = vmatprep.subr.mxu0 0.0
      %2216 = vmatpush1.msra.mxu0 0.0
      %2217 = vmatprep.subr.mxu0 0.0
      %2218 = vmatpush1.msra.mxu0 0.0
      %2219 = vmatprep.subr.mxu0 0.0
      %2220 = vmatpush1.msra.mxu0 0.0
      %2221 = vmatprep.subr.mxu0 0.0
      %2222 = vmatpush1.msra.mxu0 0.0
      %2223 = vmatprep.subr.mxu0 0.0
      %2224 = vmatpush1.msra.mxu0 0.0
      %2225 = vmatprep.subr.mxu0 0.0
      %2226 = vmatpush1.msra.mxu0 0.0
      %2227 = vmatprep.subr.mxu0 0.0
      %2228 = vmatpush1.msra.mxu0 0.0
      %2229 = vmatprep.subr.mxu0 0.0
      %2230 = vmatpush1.msra.mxu0 0.0
      %2231 = vmatprep.subr.mxu0 0.0
      %2232 = vmatpush1.msra.mxu0 0.0
      %2233 = vmatprep.subr.mxu0 0.0
      %2234 = vmatpush1.msra.mxu0 0.0
      %2235 = vmatprep.subr.mxu0 0.0
      %2236 = vmatpush1.msra.mxu0 0.0
      %2237 = vmatprep.subr.mxu0 0.0
      %2238 = vmatpush1.msra.mxu0 0.0
      %2239 = vmatprep.subr.mxu0 0.0
      %2240 = vmatpush1.msra.mxu0 0.0
      %2241 = vmatprep.subr.mxu0 0.0
      %2242 = vmatpush1.msra.mxu0 0.0
      %2243 = vmatprep.subr.mxu0 0.0
      %2244 = vmatpush1.msra.mxu0 0.0
      %2245 = vmatprep.subr.mxu0 0.0
      %2246 = vmatpush1.msra.mxu0 0.0
      %2247 = vmatprep.subr.mxu0 0.0
      %2248 = vmatpush1.msra.mxu0 0.0
      %2249 = vmatprep.subr.mxu0 0.0
      %2250 = vmatpush1.msra.mxu0 0.0
      %2251 = vmatprep.subr.mxu0 0.0
      %2252 = vmatpush1.msra.mxu0 0.0
      %2253 = vmatprep.mubr.f32.mxu0 0.0
      %2254 = vmatmul.mubr.f32.gmra.mrb[0].mxu0 %v2184
      %v2255 = vpop.f32.mrb[0].mxu0
      %v2256 = vadd.f32 0.0, %v2255
      %v2257 = vpop.f32.mrb[0].mxu0
      %2258 = vdwg.mxu0
      %v2259 = vpack.c.bf16 %v2256, %v2256
      %v2260 = vpack.c.bf16 %v526, %v526
      %v2262 = vsel %vm555, %v2259, 0
      %v2265 = vsel %vm1330, %v2260, 0
      %2267 = vmatprep.subr.bf16.mxu0 0
      %2268 = vmatpush1.bf16.msra.mxu0 %v2265
      %2269 = vmatprep.subr.bf16.mxu0 0
      %2270 = vmatpush1.bf16.msra.mxu0 0
      %2271 = vmatprep.subr.bf16.mxu0 0
      %2272 = vmatpush1.bf16.msra.mxu0 0
      %2273 = vmatprep.subr.bf16.mxu0 0
      %2274 = vmatpush1.bf16.msra.mxu0 0
      %2275 = vmatprep.subr.bf16.mxu0 0
      %2276 = vmatpush1.bf16.msra.mxu0 0
      %2277 = vmatprep.subr.bf16.mxu0 0
      %2278 = vmatpush1.bf16.msra.mxu0 0
      %2279 = vmatprep.subr.bf16.mxu0 0
      %2280 = vmatpush1.bf16.msra.mxu0 0
      %2281 = vmatprep.subr.bf16.mxu0 0
      %2282 = vmatpush1.bf16.msra.mxu0 0
      %2283 = vmatprep.subr.bf16.mxu0 0
      %2284 = vmatpush1.bf16.msra.mxu0 0
      %2285 = vmatprep.subr.bf16.mxu0 0
      %2286 = vmatpush1.bf16.msra.mxu0 0
      %2287 = vmatprep.subr.bf16.mxu0 0
      %2288 = vmatpush1.bf16.msra.mxu0 0
      %2289 = vmatprep.subr.bf16.mxu0 0
      %2290 = vmatpush1.bf16.msra.mxu0 0
      %2291 = vmatprep.subr.bf16.mxu0 0
      %2292 = vmatpush1.bf16.msra.mxu0 0
      %2293 = vmatprep.subr.bf16.mxu0 0
      %2294 = vmatpush1.bf16.msra.mxu0 0
      %2295 = vmatprep.subr.bf16.mxu0 0
      %2296 = vmatpush1.bf16.msra.mxu0 0
      %2297 = vmatprep.subr.bf16.mxu0 0
      %2298 = vmatpush1.bf16.msra.mxu0 0
      %2299 = vmatprep.mubr.bf16.mxu0 0
      %2300 = vmatmul.mubr.bf16.gmra.mrb[0].mxu0 %v2262
      %v2301 = vpop.f32.mrb[0].mxu0
      %v2302 = vadd.f32 0.0, %v2301
      %v2303 = vpop.f32.mrb[0].mxu0
      %v2304 = vpop.f32.mrb[0].mxu0
      %v2305 = vpop.f32.mrb[0].mxu0
      %2306 = vdwg.mxu0
      %v2307 = vpack.c.bf16 %v2302, %v2302
      %v2308 = vld [vmem:[%s7] sm:$0xff]
      %v2309 = vld [vmem:[%s7 + $0x8] sm:$0xff]
      %v2310 = vld [vmem:[%s7 + $0x10] sm:$0xf]
      %v2311 = vld [vmem:[%s7 + $0x14] sm:$0xff]
      %v2312 = vld [vmem:[%s7 + $0x1c] sm:$0xff]
      %v2313 = vld [vmem:[%s7 + $0x24] sm:$0xf]
      %v2320 = vunpack.c.l.b16 %v2308
      %v2321 = vunpack.c.h.b16 %v2308
      %v2322 = vunpack.c.l.b16 %v2309
      %v2323 = vunpack.c.h.b16 %v2309
      %v2324 = vunpack.c.l.b16 %v2310
      %v2325 = vunpack.c.l.b16 %v2311
      %v2326 = vunpack.c.h.b16 %v2311
      %v2327 = vunpack.c.l.b16 %v2312
      %v2328 = vunpack.c.h.b16 %v2312
      %v2329 = vunpack.c.l.b16 %v2313
      %v2330 = vpack.c.b16 %v2325, %v2320
      %v2331 = vpack.c.b16 %v2326, %v2321
      %v2332 = vpack.c.b16 %v2327, %v2322
      %v2333 = vpack.c.b16 %v2328, %v2323
      %v2334 = vpack.c.b16 %v2329, %v2324
      %v2341 = vsel %vm2050, %v2307, 0
      %2343 = vmatprep.subr.bf16.mxu0 %v2331
      %2344 = vmatpush1.bf16.msra.mxu0 %v2330
      %2345 = vmatprep.subr.bf16.mxu0 0
      %2346 = vmatpush1.bf16.msra.mxu0 0
      %2347 = vmatprep.subr.bf16.mxu0 0
      %2348 = vmatpush1.bf16.msra.mxu0 0
      %2349 = vmatprep.subr.bf16.mxu0 0
      %2350 = vmatpush1.bf16.msra.mxu0 0
      %2351 = vmatprep.subr.bf16.mxu0 0
      %2352 = vmatpush1.bf16.msra.mxu0 0
      %2353 = vmatprep.subr.bf16.mxu0 0
      %2354 = vmatpush1.bf16.msra.mxu0 0
      %2355 = vmatprep.subr.bf16.mxu0 0
      %2356 = vmatpush1.bf16.msra.mxu0 0
      %2357 = vmatprep.subr.bf16.mxu0 0
      %2358 = vmatpush1.bf16.msra.mxu0 0
      %2359 = vmatprep.subr.bf16.mxu0 0
      %2360 = vmatpush1.bf16.msra.mxu0 0
      %2361 = vmatprep.subr.bf16.mxu0 0
      %2362 = vmatpush1.bf16.msra.mxu0 0
      %2363 = vmatprep.subr.bf16.mxu0 0
      %2364 = vmatpush1.bf16.msra.mxu0 0
      %2365 = vmatprep.subr.bf16.mxu0 0
      %2366 = vmatpush1.bf16.msra.mxu0 0
      %2367 = vmatprep.subr.bf16.mxu0 0
      %2368 = vmatpush1.bf16.msra.mxu0 0
      %2369 = vmatprep.subr.bf16.mxu0 0
      %2370 = vmatpush1.bf16.msra.mxu0 0
      %2371 = vmatprep.subr.bf16.mxu0 0
      %2372 = vmatpush1.bf16.msra.mxu0 0
      %2373 = vmatprep.subr.bf16.mxu0 0
      %2374 = vmatpush1.bf16.msra.mxu0 0
      %2375 = vmatprep.mubr.bf16.mxu0 0
      %2376 = vmatmul.mubr.bf16.gmra.mrb[0].mxu0 %v2341
      %v2377 = vpop.f32.mrb[0].mxu0
      %v2378 = vadd.f32 0.0, %v2377
      %v2379 = vpop.f32.mrb[0].mxu0
      %v2380 = vadd.f32 0.0, %v2379
      %v2381 = vpop.f32.mrb[0].mxu0
      %v2382 = vpop.f32.mrb[0].mxu0
      %2383 = vdwg.mxu0
      %2384 = vmatprep.subr.bf16.mxu0 %v2333
      %2385 = vmatpush1.bf16.msra.mxu0 %v2332
      %2386 = vmatprep.subr.bf16.mxu0 0
      %2387 = vmatpush1.bf16.msra.mxu0 0
      %2388 = vmatprep.subr.bf16.mxu0 0
      %2389 = vmatpush1.bf16.msra.mxu0 0
      %2390 = vmatprep.subr.bf16.mxu0 0
      %2391 = vmatpush1.bf16.msra.mxu0 0
      %2392 = vmatprep.subr.bf16.mxu0 0
      %2393 = vmatpush1.bf16.msra.mxu0 0
      %2394 = vmatprep.subr.bf16.mxu0 0
      %2395 = vmatpush1.bf16.msra.mxu0 0
      %2396 = vmatprep.subr.bf16.mxu0 0
      %2397 = vmatpush1.bf16.msra.mxu0 0
      %2398 = vmatprep.subr.bf16.mxu0 0
      %2399 = vmatpush1.bf16.msra.mxu0 0
      %2400 = vmatprep.subr.bf16.mxu0 0
      %2401 = vmatpush1.bf16.msra.mxu0 0
      %2402 = vmatprep.subr.bf16.mxu0 0
      %2403 = vmatpush1.bf16.msra.mxu0 0
      %2404 = vmatprep.subr.bf16.mxu0 0
      %2405 = vmatpush1.bf16.msra.mxu0 0
      %2406 = vmatprep.subr.bf16.mxu0 0
      %2407 = vmatpush1.bf16.msra.mxu0 0
      %2408 = vmatprep.subr.bf16.mxu0 0
      %2409 = vmatpush1.bf16.msra.mxu0 0
      %2410 = vmatprep.subr.bf16.mxu0 0
      %2411 = vmatpush1.bf16.msra.mxu0 0
      %2412 = vmatprep.subr.bf16.mxu0 0
      %2413 = vmatpush1.bf16.msra.mxu0 0
      %2414 = vmatprep.subr.bf16.mxu0 0
      %2415 = vmatpush1.bf16.msra.mxu0 0
      %2416 = vmatprep.mubr.bf16.mxu0 0
      %2417 = vmatmul.mubr.bf16.gmra.mrb[0].mxu0 %v2341
      %v2418 = vpop.f32.mrb[0].mxu0
      %v2419 = vadd.f32 0.0, %v2418
      %v2420 = vpop.f32.mrb[0].mxu0
      %v2421 = vadd.f32 0.0, %v2420
      %v2422 = vpop.f32.mrb[0].mxu0
      %v2423 = vpop.f32.mrb[0].mxu0
      %2424 = vdwg.mxu0
      %2425 = vmatprep.subr.bf16.mxu0 0
      %2426 = vmatpush1.bf16.msra.mxu0 %v2334
      %2427 = vmatprep.subr.bf16.mxu0 0
      %2428 = vmatpush1.bf16.msra.mxu0 0
      %2429 = vmatprep.subr.bf16.mxu0 0
      %2430 = vmatpush1.bf16.msra.mxu0 0
      %2431 = vmatprep.subr.bf16.mxu0 0
      %2432 = vmatpush1.bf16.msra.mxu0 0
      %2433 = vmatprep.subr.bf16.mxu0 0
      %2434 = vmatpush1.bf16.msra.mxu0 0
      %2435 = vmatprep.subr.bf16.mxu0 0
      %2436 = vmatpush1.bf16.msra.mxu0 0
      %2437 = vmatprep.subr.bf16.mxu0 0
      %2438 = vmatpush1.bf16.msra.mxu0 0
      %2439 = vmatprep.subr.bf16.mxu0 0
      %2440 = vmatpush1.bf16.msra.mxu0 0
      %2441 = vmatprep.subr.bf16.mxu0 0
      %2442 = vmatpush1.bf16.msra.mxu0 0
      %2443 = vmatprep.subr.bf16.mxu0 0
      %2444 = vmatpush1.bf16.msra.mxu0 0
      %2445 = vmatprep.subr.bf16.mxu0 0
      %2446 = vmatpush1.bf16.msra.mxu0 0
      %2447 = vmatprep.subr.bf16.mxu0 0
      %2448 = vmatpush1.bf16.msra.mxu0 0
      %2449 = vmatprep.subr.bf16.mxu0 0
      %2450 = vmatpush1.bf16.msra.mxu0 0
      %2451 = vmatprep.subr.bf16.mxu0 0
      %2452 = vmatpush1.bf16.msra.mxu0 0
      %2453 = vmatprep.subr.bf16.mxu0 0
      %2454 = vmatpush1.bf16.msra.mxu0 0
      %2455 = vmatprep.subr.bf16.mxu0 0
      %2456 = vmatpush1.bf16.msra.mxu0 0
      %2457 = vmatprep.mubr.bf16.mxu0 0
      %2458 = vmatmul.mubr.bf16.gmra.mrb[0].mxu0 %v2341
      %v2459 = vpop.f32.mrb[0].mxu0
      %v2460 = vadd.f32 0.0, %v2459
      %v2461 = vpop.f32.mrb[0].mxu0
      %v2462 = vpop.f32.mrb[0].mxu0
      %v2463 = vpop.f32.mrb[0].mxu0
      %2464 = vdwg.mxu0
      %v2465 = vadd.f32 %v2089, %v2378
      %v2466 = vadd.f32 %v2091, %v2380
      %v2467 = vadd.f32 %v2130, %v2419
      %v2468 = vadd.f32 %v2132, %v2421
      %v2469 = vadd.f32 %v2171, %v2460
      %v2470 = vpack.c.bf16 %v1238, %v1238
      %2472 = vset.pattern.permute.xlu0 0
      %2473 = vperm.xlu0 %2472, %v1237
      %v2474 = vpop.permute.xlu0 %2473
      %v2475 = vrot.slane %v2179, 4
      %v2476 = vrot.slane %v2474, 4
      %v2477 = vsel %vm548, %v2475, %v2476
      %v2479 = vmul.f32 %v527, %v2477
      %v2480 = vmul.f32 %v528, %v2477
      %v2481 = vmul.f32 %v529, %v2477
      %v2482 = vmul.f32 %v530, %v2477
      %v2483 = vmul.f32 %v531, %v2477
      %v2484 = vpack.c.bf16 %v2479, %v2479
      %v2485 = vpack.c.bf16 %v2480, %v2480
      %v2486 = vpack.c.bf16 %v2481, %v2481
      %v2487 = vpack.c.bf16 %v2482, %v2482
      %v2488 = vpack.c.bf16 %v2483, %v2483
      %2490 = vrot.lane.b32.xlu0 %v2470, 116
      %v2491 = vpop.permute.xlu0 %2490
      %v2493 = vsel %vm1048, %v2491, 0
      %v2496 = vsel %vm548, %v2484, 0
      %v2499 = vsel %vm548, %v2485, 0
      %v2502 = vsel %vm548, %v2486, 0
      %v2505 = vsel %vm548, %v2487, 0
      %v2508 = vsel %vm548, %v2488, 0
      %2510 = vmatprep.subr.bf16.mxu0 %v2499
      %2511 = vmatpush1.bf16.msra.mxu0 %v2496
      %2512 = vmatprep.subr.bf16.mxu0 0
      %2513 = vmatpush1.bf16.msra.mxu0 0
      %2514 = vmatprep.subr.bf16.mxu0 0
      %2515 = vmatpush1.bf16.msra.mxu0 0
      %2516 = vmatprep.subr.bf16.mxu0 0
      %2517 = vmatpush1.bf16.msra.mxu0 0
      %2518 = vmatprep.subr.bf16.mxu0 0
      %2519 = vmatpush1.bf16.msra.mxu0 0
      %2520 = vmatprep.subr.bf16.mxu0 0
      %2521 = vmatpush1.bf16.msra.mxu0 0
      %2522 = vmatprep.subr.bf16.mxu0 0
      %2523 = vmatpush1.bf16.msra.mxu0 0
      %2524 = vmatprep.subr.bf16.mxu0 0
      %2525 = vmatpush1.bf16.msra.mxu0 0
      %2526 = vmatprep.subr.bf16.mxu0 0
      %2527 = vmatpush1.bf16.msra.mxu0 0
      %2528 = vmatprep.subr.bf16.mxu0 0
      %2529 = vmatpush1.bf16.msra.mxu0 0
      %2530 = vmatprep.subr.bf16.mxu0 0
      %2531 = vmatpush1.bf16.msra.mxu0 0
      %2532 = vmatprep.subr.bf16.mxu0 0
      %2533 = vmatpush1.bf16.msra.mxu0 0
      %2534 = vmatprep.subr.bf16.mxu0 0
      %2535 = vmatpush1.bf16.msra.mxu0 0
      %2536 = vmatprep.subr.bf16.mxu0 0
      %2537 = vmatpush1.bf16.msra.mxu0 0
      %2538 = vmatprep.subr.bf16.mxu0 0
      %2539 = vmatpush1.bf16.msra.mxu0 0
      %2540 = vmatprep.subr.bf16.mxu0 0
      %2541 = vmatpush1.bf16.msra.mxu0 0
      %2542 = vmatprep.mubr.bf16.mxu0 0
      %2543 = vmatmul.mubr.bf16.gmra.mrb[0].mxu0 %v2493
      %v2544 = vpop.f32.mrb[0].mxu0
      %v2545 = vadd.f32 0.0, %v2544
      %v2546 = vpop.f32.mrb[0].mxu0
      %v2547 = vadd.f32 0.0, %v2546
      %v2548 = vpop.f32.mrb[0].mxu0
      %v2549 = vpop.f32.mrb[0].mxu0
      %2550 = vdwg.mxu0
      %2551 = vmatprep.subr.bf16.mxu0 %v2505
      %2552 = vmatpush1.bf16.msra.mxu0 %v2502
      %2553 = vmatprep.subr.bf16.mxu0 0
      %2554 = vmatpush1.bf16.msra.mxu0 0
      %2555 = vmatprep.subr.bf16.mxu0 0
      %2556 = vmatpush1.bf16.msra.mxu0 0
      %2557 = vmatprep.subr.bf16.mxu0 0
      %2558 = vmatpush1.bf16.msra.mxu0 0
      %2559 = vmatprep.subr.bf16.mxu0 0
      %2560 = vmatpush1.bf16.msra.mxu0 0
      %2561 = vmatprep.subr.bf16.mxu0 0
      %2562 = vmatpush1.bf16.msra.mxu0 0
      %2563 = vmatprep.subr.bf16.mxu0 0
      %2564 = vmatpush1.bf16.msra.mxu0 0
      %2565 = vmatprep.subr.bf16.mxu0 0
      %2566 = vmatpush1.bf16.msra.mxu0 0
      %2567 = vmatprep.subr.bf16.mxu0 0
      %2568 = vmatpush1.bf16.msra.mxu0 0
      %2569 = vmatprep.subr.bf16.mxu0 0
      %2570 = vmatpush1.bf16.msra.mxu0 0
      %2571 = vmatprep.subr.bf16.mxu0 0
      %2572 = vmatpush1.bf16.msra.mxu0 0
      %2573 = vmatprep.subr.bf16.mxu0 0
      %2574 = vmatpush1.bf16.msra.mxu0 0
      %2575 = vmatprep.subr.bf16.mxu0 0
      %2576 = vmatpush1.bf16.msra.mxu0 0
      %2577 = vmatprep.subr.bf16.mxu0 0
      %2578 = vmatpush1.bf16.msra.mxu0 0
      %2579 = vmatprep.subr.bf16.mxu0 0
      %2580 = vmatpush1.bf16.msra.mxu0 0
      %2581 = vmatprep.subr.bf16.mxu0 0
      %2582 = vmatpush1.bf16.msra.mxu0 0
      %2583 = vmatprep.mubr.bf16.mxu0 0
      %2584 = vmatmul.mubr.bf16.gmra.mrb[0].mxu0 %v2493
      %v2585 = vpop.f32.mrb[0].mxu0
      %v2586 = vadd.f32 0.0, %v2585
      %v2587 = vpop.f32.mrb[0].mxu0
      %v2588 = vadd.f32 0.0, %v2587
      %v2589 = vpop.f32.mrb[0].mxu0
      %v2590 = vpop.f32.mrb[0].mxu0
      %2591 = vdwg.mxu0
      %2592 = vmatprep.subr.bf16.mxu0 0
      %2593 = vmatpush1.bf16.msra.mxu0 %v2508
      %2594 = vmatprep.subr.bf16.mxu0 0
      %2595 = vmatpush1.bf16.msra.mxu0 0
      %2596 = vmatprep.subr.bf16.mxu0 0
      %2597 = vmatpush1.bf16.msra.mxu0 0
      %2598 = vmatprep.subr.bf16.mxu0 0
      %2599 = vmatpush1.bf16.msra.mxu0 0
      %2600 = vmatprep.subr.bf16.mxu0 0
      %2601 = vmatpush1.bf16.msra.mxu0 0
      %2602 = vmatprep.subr.bf16.mxu0 0
      %2603 = vmatpush1.bf16.msra.mxu0 0
      %2604 = vmatprep.subr.bf16.mxu0 0
      %2605 = vmatpush1.bf16.msra.mxu0 0
      %2606 = vmatprep.subr.bf16.mxu0 0
      %2607 = vmatpush1.bf16.msra.mxu0 0
      %2608 = vmatprep.subr.bf16.mxu0 0
      %2609 = vmatpush1.bf16.msra.mxu0 0
      %2610 = vmatprep.subr.bf16.mxu0 0
      %2611 = vmatpush1.bf16.msra.mxu0 0
      %2612 = vmatprep.subr.bf16.mxu0 0
      %2613 = vmatpush1.bf16.msra.mxu0 0
      %2614 = vmatprep.subr.bf16.mxu0 0
      %2615 = vmatpush1.bf16.msra.mxu0 0
      %2616 = vmatprep.subr.bf16.mxu0 0
      %2617 = vmatpush1.bf16.msra.mxu0 0
      %2618 = vmatprep.subr.bf16.mxu0 0
      %2619 = vmatpush1.bf16.msra.mxu0 0
      %2620 = vmatprep.subr.bf16.mxu0 0
      %2621 = vmatpush1.bf16.msra.mxu0 0
      %2622 = vmatprep.subr.bf16.mxu0 0
      %2623 = vmatpush1.bf16.msra.mxu0 0
      %2624 = vmatprep.mubr.bf16.mxu0 0
      %2625 = vmatmul.mubr.bf16.gmra.mrb[0].mxu0 %v2493
      %v2626 = vpop.f32.mrb[0].mxu0
      %v2627 = vadd.f32 0.0, %v2626
      %v2628 = vpop.f32.mrb[0].mxu0
      %v2629 = vpop.f32.mrb[0].mxu0
      %v2630 = vpop.f32.mrb[0].mxu0
      %2631 = vdwg.mxu0
      %v2632 = vadd.f32 %v2465, %v2545
      %v2633 = vadd.f32 %v2466, %v2547
      %v2634 = vadd.f32 %v2467, %v2586
      %v2635 = vadd.f32 %v2468, %v2588
      %v2636 = vadd.f32 %v2469, %v2627
      %2637 = vst [vmem:[%s521] sm:$0xff] %v2632
      %2638 = vst [vmem:[%s521 + $0x8] sm:$0xff] %v2633
      %2639 = vst [vmem:[%s521 + $0x10] sm:$0xff] %v2634
      %2640 = vst [vmem:[%s521 + $0x18] sm:$0xff] %v2635
      %2641 = vst.msk [vmem:[%s521 + $0x20] sm:$0xff] %vm804, %v2636
      %p2642 = scmp.lt.s32.totalorder %s25, 1
      %s2643 = scalar_select %p2642, %s25, 1
      %s2644 = smul.addr %s2643, 5
      %s2645 = smul.addr %s2644, 8
      %s2646 = scalar_lea.vmem %s14, %s2645
      // Predicated region
      $region77: #{sppblock_forward.1} parent=75 // pred_check
        %p2647 = pneg %p357
      $region78: #{sppblock_forward.1} parent=75 // pred_check_branch
        %2649 = sbr.rel (%p2647) target = $region80
      $region79: #{sppblock_forward.1} parent=75 // pred_region
        _
      $region80: #{sppblock_forward.1} parent=75 // pred_fallthru
        _
    $region76: #{sppblock_forward.1} parent=5 // pred_fallthru
      _
    %p2650 = scmp.le.s32.totalorder 2, %s20
    // Predicated region
    $region81: #{sppblock_forward.1} parent=5 // pred_check
      %p2651 = pneg %p2650
    $region82: #{sppblock_forward.1} parent=5 // pred_check_branch
      %2653 = sbr.rel (%p2651) target = $region84
    $region83: #{sppblock_forward.1} parent=5 // pred_region
      %s2654 = ssub.s32 %s20, 2
      // Predicated region
      $region85: #{sppblock_forward.1} parent=83 // pred_check
        %p2655 = pneg %p363
      $region86: #{sppblock_forward.1} parent=83 // pred_check_branch
        %2657 = sbr.rel (%p2655) target = $region88
      $region87: #{sppblock_forward.1} parent=83 // pred_region
        %p2658 = scmp.lt.s32.totalorder %s26, 1
        %s2659 = scalar_select %p2658, %s26, 1
        %s2660 = smul.addr %s2659, 5
        %s2661 = smul.addr %s2660, 8
        %s2662 = scalar_lea.vmem %s14, %s2661
      $region88: #{sppblock_forward.1} parent=83 // pred_fallthru
        _
    $region84: #{sppblock_forward.1} parent=5 // pred_fallthru
      _
  $region6: #{sppblock_forward.1} parent=0 // loop_footer
    %s24 = sadd.s32 1, %s20
  $region7: #{sppblock_forward.1} parent=0 // loop_footer_branch
    %19 = sbr.rel target = $region3
  $region8: #{sppblock_forward.1} parent=0 // loop_exit
    _

</llo_original>
